<compile_context>
chip_gen: v7x
topology: tpu7x:2x2x1
jax: 0.10.0
libtpu: 0.0.40
codegen_flags: <defaults>
</compile_context>

<pallas_src>
import functools

import jax
import jax.numpy as jnp
from jax.experimental import pallas as pl
from jax.experimental.pallas import tpu as pltpu


# ---------------------------------------------------------------------------
# helpers
# ---------------------------------------------------------------------------
def _lane_shift(x, shift, length):
    """out[..., t] = x[..., (t + shift) % length] for a static integer shift."""
    a = shift % length
    if a == 0:
        return x
    # Two lane slices + one lane concat -> cheap, always-lowerable rotation.
    return jnp.concatenate([x[..., a:], x[..., :a]], axis=-1)


# ---------------------------------------------------------------------------
# fused kernel: circular conv -> BatchNorm (batch stats, f32) -> LeakyReLU
# ---------------------------------------------------------------------------
def _fused_basic_block_kernel(x_ref, w_ref, g_ref, bt_ref, o_ref, y_ref, *,
                              kh, kw, dil, n_adj, H, W, eps, slope, inv_count):
    """One output-channel block of the fused BasicBlock forward.

    x_ref  : (B, Cin, H*W)      NCHW activations, (H, W) flattened (native dtype)
    w_ref  : (KH*KW, CB, Cin)   conv weight, tap-major (i, j) ordering
    g_ref  : (CB, 1)            BN weight (gamma), f32
    bt_ref : (CB, 1)            BN bias   (beta),  f32
    o_ref  : (B, CB, Ho*W)      output block (lane-dense spatial axis)
    y_ref  : (B, CB, Ho*W) f32  VMEM scratch holding the pre-BN conv output
    """
    B, C, HW = x_ref.shape
    CB = w_ref.shape[1]
    Ho = H - dil * (kh - 1)
    now = Ho * W
    f32 = jnp.float32

    # Circular-wrap masks depend only on the column shift s -> hoisted out of
    # both the batch loop and the KH row loop (computed once per kernel call).
    shifts = [(j - n_adj) * dil for j in range(kw)]
    masks = {}
    if H > 1:
        wpos = jax.lax.broadcasted_iota(jnp.int32, (C, HW), 1) % W
        for s in shifts:
            if s != 0:
                masks[s] = jnp.logical_and(wpos + s >= 0, wpos + s < W)

    ssum = jnp.zeros((CB, 1), f32)
    ssq = jnp.zeros((CB, 1), f32)
    for b in range(B):                                    # static unroll, small B
        x = x_ref[b]                                      # (Cin, H*W), native dtype
        acc = jnp.zeros((CB, now), f32)
        for j, s in enumerate(shifts):                    # column taps: one shift per j
            if s == 0:
                xs = x
            elif H == 1:
                # 1-D circular conv: the row IS the whole lane extent -> single rotation.
                xs = _lane_shift(x, s, HW)
            else:
                # 2-D: circular wrap inside each row of W lanes.
                main = _lane_shift(x, s, HW)
                wrap = _lane_shift(x, s - W if s > 0 else s + W, HW)
                xs = jnp.where(masks[s], main, wrap)
            for i in range(kh):                           # KH row taps reuse xs
                row0 = i * dil * W
                tap = xs if (row0 == 0 and now == HW) else xs[:, row0:row0 + now]
                acc = acc + jnp.dot(w_ref[i * kw + j], tap,
                                    preferred_element_type=f32)
        # NOTE: conv bias is intentionally omitted -- it cancels exactly under
        # the batch-statistics BatchNorm below.
        y_ref[b] = acc
        ssum = ssum + jnp.sum(acc, axis=1, keepdims=True)
        ssq = ssq + jnp.sum(acc * acc, axis=1, keepdims=True)

    # BatchNorm batch statistics (biased variance), computed entirely in f32.
    mean = ssum * inv_count
    var = jnp.maximum(ssq * inv_count - mean * mean, 0.0)
    scale = jax.lax.rsqrt(var + eps) * g_ref[...].astype(f32)
    shift = bt_ref[...].astype(f32) - mean * scale
    for b in range(B):
        z = y_ref[b] * scale + shift
        o_ref[b] = jnp.where(z >= 0.0, z, slope * z).astype(o_ref.dtype)


# ---------------------------------------------------------------------------
# BasicBlock forward wrapper
# ---------------------------------------------------------------------------
def basic_block_forward(x, weight, bias, gamma, beta, *, n_adj=4, dilation=1,
                        eps=1e-5, negative_slope=0.01):
    """BasicBlock forward: circular conv -> BatchNorm (batch stats) -> LeakyReLU.

    x      : (B, C, L)    for CircConv / DilatedCircConv   (circular along L)
             (B, C, H, W) for DilatedCircConv2D            (circular along W)
    weight : (Cout, Cin, 2*n_adj+1) or (Cout, Cin, KH, 2*n_adj+1)
    bias   : (Cout,)  conv bias (mathematically cancelled by train-mode BN,
             therefore not fed to the kernel)
    gamma, beta : (Cout,)  BatchNorm affine parameters.
    """
    is_1d = (x.ndim == 3)
    if is_1d:
        B, C, L = x.shape
        x4 = x.reshape(B, C, 1, L)
        w4 = weight.reshape(weight.shape[0], weight.shape[1], 1, weight.shape[2])
    else:
        x4, w4 = x, weight
    B, C, H, W = x4.shape
    Cout, Cin, KH, KW = w4.shape
    assert Cin == C and KW == 2 * n_adj + 1
    pad = n_adj * dilation
    assert pad < W, "in-kernel circular shift assumes at most one full wrap"
    Ho = H - dilation * (KH - 1)
    assert Ho >= 1
    now = Ho * W
    KT = KH * KW
    del bias  # exactly cancelled by the batch-statistics BatchNorm that follows

    # Free (metadata-only) reshapes -- no NCHW<->NHWC transpose of activations.
    x2 = x4.reshape(B, C, H * W)
    # Weight: (Cout, Cin, KH, KW) -> (KH*KW, Cout, Cin), tap-major (tiny tensor).
    w3 = jnp.transpose(w4, (2, 3, 0, 1)).reshape(KT, Cout, Cin)
    g2 = gamma.reshape(Cout, 1).astype(jnp.float32)
    b2 = beta.reshape(Cout, 1).astype(jnp.float32)

    itemsize = jnp.dtype(x.dtype).itemsize
    w_isz = jnp.dtype(w3.dtype).itemsize

    def vmem_footprint(cbs):
        x_b = B * C * H * W * itemsize
        w_b = KT * max(cbs, 8) * max(Cin, 128) * w_isz            # tile-padded
        y_b = B * cbs * max(now, 128) * 4                         # f32 scratch
        o_b = B * cbs * max(now, 128) * itemsize
        p_b = 2 * max(cbs, 8) * 128 * 4
        return 2 * (x_b + w_b + p_b + o_b) + y_b                  # incl. double-buffer

    budget = 40 * 1024 * 1024
    cbs = Cout
    while vmem_footprint(cbs) > budget and cbs % 16 == 0:
        cbs //= 2                       # stays a multiple of 8 once it splits
    if vmem_footprint(cbs) > budget:
        raise NotImplementedError(
            "BasicBlock fused kernel working set does not fit in VMEM")

    kern = functools.partial(
        _fused_basic_block_kernel, kh=KH, kw=KW, dil=dilation, n_adj=n_adj,
        H=H, W=W, eps=eps, slope=negative_slope,
        inv_count=1.0 / float(B * now))

    out = pl.pallas_call(
        kern,
        out_shape=jax.ShapeDtypeStruct((B, Cout, now), x.dtype),
        grid_spec=pltpu.PrefetchScalarGridSpec(
            num_scalar_prefetch=0,
            grid=(Cout // cbs,),
            in_specs=[
                pl.BlockSpec((B, C, H * W), lambda c: (0, 0, 0)),   # resident
                pl.BlockSpec((KT, cbs, Cin), lambda c: (0, c, 0)),
                pl.BlockSpec((cbs, 1), lambda c: (c, 0)),
                pl.BlockSpec((cbs, 1), lambda c: (c, 0)),
            ],
            out_specs=pl.BlockSpec((B, cbs, now), lambda c: (0, c, 0)),
            scratch_shapes=[pltpu.VMEM((B, cbs, now), jnp.float32)],
        ),
        compiler_params=pltpu.CompilerParams(
            dimension_semantics=("parallel",),
            vmem_limit_bytes=48 * 1024 * 1024),
        cost_estimate=pl.CostEstimate(
            flops=int(2 * B * Cout * KT * Cin * now + 8 * B * Cout * now),
            transcendentals=int(Cout),
            bytes_accessed=int(x2.size * itemsize + w3.size * w_isz
                               + (g2.size + b2.size) * 4
                               + B * Cout * now * itemsize)),
    )(x2, w3, g2, b2)

    if is_1d:
        return out.reshape(B, Cout, W)
    return out.reshape(B, Cout, Ho, W)      # free reshape back to NCHW


# ---------------------------------------------------------------------------
# pure-JAX reference (mirrors the PyTorch BasicBlock forward) + init helpers
# ---------------------------------------------------------------------------
def _ref_basic_block(x, weight, bias, gamma, beta, *, n_adj, dilation,
                     eps=1e-5, negative_slope=0.01):
    is_1d = (x.ndim == 3)
    if is_1d:
        x4 = x[:, :, None, :]
        w4 = weight[:, :, None, :]
    else:
        x4, w4 = x, weight
    pad = n_adj * dilation
    if n_adj != 0:
        x4 = jnp.concatenate([x4[..., -pad:], x4, x4[..., :pad]], axis=3)
    y = jax.lax.conv_general_dilated(
        x4, w4, window_strides=(1, 1), padding="VALID",
        rhs_dilation=(dilation, dilation),
        dimension_numbers=("NCHW", "OIHW", "NCHW"))
    y = y + bias.reshape(1, -1, 1, 1)
    mean = jnp.mean(y, axis=(0, 2, 3), keepdims=True)
    var = jnp.mean(jnp.square(y - mean), axis=(0, 2, 3), keepdims=True)
    z = (y - mean) * jax.lax.rsqrt(var + eps) * gamma.reshape(1, -1, 1, 1) \
        + beta.reshape(1, -1, 1, 1)
    z = jnp.where(z >= 0.0, z, negative_slope * z)
    if is_1d:
        z = z[:, :, 0, :]
    return z


def _init_conv_params(key, cin, cout, kernel_h, n_adj, *, conv1d=False):
    kw = 2 * n_adj + 1
    fan_in = cin * kernel_h * kw
    bound = 1.0 / (fan_in ** 0.5)
    k_w, k_b = jax.random.split(key)
    shape = (cout, cin, kw) if conv1d else (cout, cin, kernel_h, kw)
    weight = jax.random.uniform(k_w, shape, jnp.float32, -bound, bound)
    bias = jax.random.uniform(k_b, (cout,), jnp.float32, -bound, bound)
    return weight, bias


def _init_bn_params(key, cout):
    k_g, k_b = jax.random.split(key)
    gamma = jax.random.uniform(k_g, (cout,), jnp.float32, 0.5, 1.5)
    beta = jax.random.uniform(k_b, (cout,), jnp.float32, -0.5, 0.5)
    return gamma, beta


def _check(name, got, want, atol=5e-4, rtol=5e-4):
    assert got.shape == want.shape, (name, got.shape, want.shape)
    err = float(jnp.max(jnp.abs(got - want)))
    assert jnp.allclose(got, want, atol=atol, rtol=rtol), (name, err)


if __name__ == "__main__":
    key = jax.random.PRNGKey(0)
    kx1, kx2, kc1, kc2, kc3, kb1, kb2, kb3 = jax.random.split(key, 8)

    # ---- Config 1: BasicBlock('dgrid2d'), kernel_h=1, dilation=1 -------------
    B, C, H, W = 2, 4, 16, 16
    x = jax.random.normal(kx1, (B, C, H, W), jnp.float32)
    w1, b1 = _init_conv_params(kc1, C, C, 1, 4)
    g1, be1 = _init_bn_params(kb1, C)
    y1 = basic_block_forward(x, w1, b1, g1, be1, n_adj=4, dilation=1)
    jax.block_until_ready(y1)
    r1 = _ref_basic_block(x, w1, b1, g1, be1, n_adj=4, dilation=1)
    assert y1.shape == (B, C, H, W)
    _check("dgrid2d_kh1", y1, r1)

    # ---- Config 2: BasicBlock('dgrid2d'), kernel_h=3, dilation=2, Cout=8 -----
    w2, b2 = _init_conv_params(kc2, C, 8, 3, 4)
    g2, be2 = _init_bn_params(kb2, 8)
    y2 = basic_block_forward(x, w2, b2, g2, be2, n_adj=4, dilation=2)
    jax.block_until_ready(y2)
    r2 = _ref_basic_block(x, w2, b2, g2, be2, n_adj=4, dilation=2)
    assert y2.shape == (B, 8, H - 2 * 2, W)
    _check("dgrid2d_kh3", y2, r2)

    # ---- Config 3: BasicBlock('dgrid') -- 1-D dilated circular conv ----------
    L = 40
    x3 = jax.random.normal(kx2, (B, C, L), jnp.float32)
    w3, b3 = _init_conv_params(kc3, C, C, 1, 4, conv1d=True)
    g3, be3 = _init_bn_params(kb3, C)
    y3 = basic_block_forward(x3, w3, b3, g3, be3, n_adj=4, dilation=1)
    jax.block_until_ready(y3)
    r3 = _ref_basic_block(x3, w3, b3, g3, be3, n_adj=4, dilation=1)
    assert y3.shape == (B, C, L)
    _check("dgrid_1d", y3, r3)

    print("KERNEL_OK")
</pallas_src>

<mosaic_0001>
module attributes {stable_mosaic.version = 11 : i64} {
  func.func @_fused_basic_block_kernel(%arg0: i32, %arg1: memref<2x4x256xf32, #tpu.memory_space<vmem>>, %arg2: memref<9x4x4xf32, #tpu.memory_space<vmem>>, %arg3: memref<4x1xf32, #tpu.memory_space<vmem>>, %arg4: memref<4x1xf32, #tpu.memory_space<vmem>>, %arg5: memref<2x4x256xf32, #tpu.memory_space<vmem>>, %arg6: memref<2x4x256xf32, #tpu.memory_space<vmem>>) attributes {dimension_semantics = [#tpu.dimension_semantics<parallel>], iteration_bounds = array<i64: 1>, scalar_prefetch = 0 : i64, scratch_operands = 1 : i64, tpu.core_type = #tpu.core_type<tc>, window_params = [{pipeline_mode = #tpu.pipeline_mode<synchronous>, transform_indices = @transform_0, window_bounds = array<i64: 2, 4, 256>}, {transform_indices = @transform_1, window_bounds = array<i64: 9, 4, 4>}, {transform_indices = @transform_2, window_bounds = array<i64: 4, 1>}, {transform_indices = @transform_3, window_bounds = array<i64: 4, 1>}, {transform_indices = @transform_4, window_bounds = array<i64: 2, 4, 256>}]} {
    %0 = tpu.iota {dimensions = array<i32: 1>} : vector<4x256xi32>
    %c16_i32 = arith.constant 16 : i32
    %c0_i32 = arith.constant 0 : i32
    %1 = arith.cmpi eq, %c16_i32, %c0_i32 : i32
    %c1_i32 = arith.constant 1 : i32
    %2 = arith.select %1, %c1_i32, %c16_i32 : i32
    %3 = vector.broadcast %2 : i32 to vector<4x256xi32>
    %4 = arith.remsi %0, %3 : vector<4x256xi32>
    %c0_i32_0 = arith.constant 0 : i32
    %5 = vector.broadcast %c0_i32_0 : i32 to vector<4x256xi32>
    %6 = arith.cmpi ne, %4, %5 : vector<4x256xi32>
    %c0_i32_1 = arith.constant 0 : i32
    %7 = vector.broadcast %c0_i32_1 : i32 to vector<4x256xi32>
    %8 = arith.cmpi slt, %4, %7 : vector<4x256xi32>
    %c0_i32_2 = arith.constant 0 : i32
    %9 = arith.cmpi slt, %2, %c0_i32_2 : i32
    %10 = vector.broadcast %9 : i1 to vector<4x256xi1>
    %11 = vector.broadcast %10 : vector<4x256xi1> to vector<4x256xi1>
    %12 = arith.xori %8, %11 : vector<4x256xi1>
    %13 = arith.andi %12, %6 : vector<4x256xi1>
    %14 = vector.broadcast %2 : i32 to vector<4x256xi32>
    %15 = arith.addi %4, %14 : vector<4x256xi32>
    %16 = arith.select %13, %15, %4 : vector<4x256xi1>, vector<4x256xi32>
    %c-4_i32 = arith.constant -4 : i32
    %17 = vector.broadcast %c-4_i32 : i32 to vector<4x256xi32>
    %18 = arith.addi %16, %17 : vector<4x256xi32>
    %c0_i32_3 = arith.constant 0 : i32
    %19 = vector.broadcast %c0_i32_3 : i32 to vector<4x256xi32>
    %20 = arith.cmpi sge, %18, %19 : vector<4x256xi32>
    %c-4_i32_4 = arith.constant -4 : i32
    %21 = vector.broadcast %c-4_i32_4 : i32 to vector<4x256xi32>
    %22 = arith.addi %16, %21 : vector<4x256xi32>
    %c16_i32_5 = arith.constant 16 : i32
    %23 = vector.broadcast %c16_i32_5 : i32 to vector<4x256xi32>
    %24 = arith.cmpi slt, %22, %23 : vector<4x256xi32>
    %25 = arith.andi %20, %24 : vector<4x256xi1>
    %c-3_i32 = arith.constant -3 : i32
    %26 = vector.broadcast %c-3_i32 : i32 to vector<4x256xi32>
    %27 = arith.addi %16, %26 : vector<4x256xi32>
    %c0_i32_6 = arith.constant 0 : i32
    %28 = vector.broadcast %c0_i32_6 : i32 to vector<4x256xi32>
    %29 = arith.cmpi sge, %27, %28 : vector<4x256xi32>
    %c-3_i32_7 = arith.constant -3 : i32
    %30 = vector.broadcast %c-3_i32_7 : i32 to vector<4x256xi32>
    %31 = arith.addi %16, %30 : vector<4x256xi32>
    %c16_i32_8 = arith.constant 16 : i32
    %32 = vector.broadcast %c16_i32_8 : i32 to vector<4x256xi32>
    %33 = arith.cmpi slt, %31, %32 : vector<4x256xi32>
    %34 = arith.andi %29, %33 : vector<4x256xi1>
    %c-2_i32 = arith.constant -2 : i32
    %35 = vector.broadcast %c-2_i32 : i32 to vector<4x256xi32>
    %36 = arith.addi %16, %35 : vector<4x256xi32>
    %c0_i32_9 = arith.constant 0 : i32
    %37 = vector.broadcast %c0_i32_9 : i32 to vector<4x256xi32>
    %38 = arith.cmpi sge, %36, %37 : vector<4x256xi32>
    %c-2_i32_10 = arith.constant -2 : i32
    %39 = vector.broadcast %c-2_i32_10 : i32 to vector<4x256xi32>
    %40 = arith.addi %16, %39 : vector<4x256xi32>
    %c16_i32_11 = arith.constant 16 : i32
    %41 = vector.broadcast %c16_i32_11 : i32 to vector<4x256xi32>
    %42 = arith.cmpi slt, %40, %41 : vector<4x256xi32>
    %43 = arith.andi %38, %42 : vector<4x256xi1>
    %c-1_i32 = arith.constant -1 : i32
    %44 = vector.broadcast %c-1_i32 : i32 to vector<4x256xi32>
    %45 = arith.addi %16, %44 : vector<4x256xi32>
    %c0_i32_12 = arith.constant 0 : i32
    %46 = vector.broadcast %c0_i32_12 : i32 to vector<4x256xi32>
    %47 = arith.cmpi sge, %45, %46 : vector<4x256xi32>
    %c-1_i32_13 = arith.constant -1 : i32
    %48 = vector.broadcast %c-1_i32_13 : i32 to vector<4x256xi32>
    %49 = arith.addi %16, %48 : vector<4x256xi32>
    %c16_i32_14 = arith.constant 16 : i32
    %50 = vector.broadcast %c16_i32_14 : i32 to vector<4x256xi32>
    %51 = arith.cmpi slt, %49, %50 : vector<4x256xi32>
    %52 = arith.andi %47, %51 : vector<4x256xi1>
    %c1_i32_15 = arith.constant 1 : i32
    %53 = vector.broadcast %c1_i32_15 : i32 to vector<4x256xi32>
    %54 = arith.addi %16, %53 : vector<4x256xi32>
    %c0_i32_16 = arith.constant 0 : i32
    %55 = vector.broadcast %c0_i32_16 : i32 to vector<4x256xi32>
    %56 = arith.cmpi sge, %54, %55 : vector<4x256xi32>
    %c1_i32_17 = arith.constant 1 : i32
    %57 = vector.broadcast %c1_i32_17 : i32 to vector<4x256xi32>
    %58 = arith.addi %16, %57 : vector<4x256xi32>
    %c16_i32_18 = arith.constant 16 : i32
    %59 = vector.broadcast %c16_i32_18 : i32 to vector<4x256xi32>
    %60 = arith.cmpi slt, %58, %59 : vector<4x256xi32>
    %61 = arith.andi %56, %60 : vector<4x256xi1>
    %c2_i32 = arith.constant 2 : i32
    %62 = vector.broadcast %c2_i32 : i32 to vector<4x256xi32>
    %63 = arith.addi %16, %62 : vector<4x256xi32>
    %c0_i32_19 = arith.constant 0 : i32
    %64 = vector.broadcast %c0_i32_19 : i32 to vector<4x256xi32>
    %65 = arith.cmpi sge, %63, %64 : vector<4x256xi32>
    %c2_i32_20 = arith.constant 2 : i32
    %66 = vector.broadcast %c2_i32_20 : i32 to vector<4x256xi32>
    %67 = arith.addi %16, %66 : vector<4x256xi32>
    %c16_i32_21 = arith.constant 16 : i32
    %68 = vector.broadcast %c16_i32_21 : i32 to vector<4x256xi32>
    %69 = arith.cmpi slt, %67, %68 : vector<4x256xi32>
    %70 = arith.andi %65, %69 : vector<4x256xi1>
    %c3_i32 = arith.constant 3 : i32
    %71 = vector.broadcast %c3_i32 : i32 to vector<4x256xi32>
    %72 = arith.addi %16, %71 : vector<4x256xi32>
    %c0_i32_22 = arith.constant 0 : i32
    %73 = vector.broadcast %c0_i32_22 : i32 to vector<4x256xi32>
    %74 = arith.cmpi sge, %72, %73 : vector<4x256xi32>
    %c3_i32_23 = arith.constant 3 : i32
    %75 = vector.broadcast %c3_i32_23 : i32 to vector<4x256xi32>
    %76 = arith.addi %16, %75 : vector<4x256xi32>
    %c16_i32_24 = arith.constant 16 : i32
    %77 = vector.broadcast %c16_i32_24 : i32 to vector<4x256xi32>
    %78 = arith.cmpi slt, %76, %77 : vector<4x256xi32>
    %79 = arith.andi %74, %78 : vector<4x256xi1>
    %c4_i32 = arith.constant 4 : i32
    %80 = vector.broadcast %c4_i32 : i32 to vector<4x256xi32>
    %81 = arith.addi %16, %80 : vector<4x256xi32>
    %c0_i32_25 = arith.constant 0 : i32
    %82 = vector.broadcast %c0_i32_25 : i32 to vector<4x256xi32>
    %83 = arith.cmpi sge, %81, %82 : vector<4x256xi32>
    %c4_i32_26 = arith.constant 4 : i32
    %84 = vector.broadcast %c4_i32_26 : i32 to vector<4x256xi32>
    %85 = arith.addi %16, %84 : vector<4x256xi32>
    %c16_i32_27 = arith.constant 16 : i32
    %86 = vector.broadcast %c16_i32_27 : i32 to vector<4x256xi32>
    %87 = arith.cmpi slt, %85, %86 : vector<4x256xi32>
    %88 = arith.andi %83, %87 : vector<4x256xi1>
    %cst = arith.constant 0.000000e+00 : f32
    %89 = vector.broadcast %cst : f32 to vector<4x1xf32>
    %cst_28 = arith.constant 0.000000e+00 : f32
    %90 = vector.broadcast %cst_28 : f32 to vector<4x1xf32>
    %c0 = arith.constant 0 : index
    %c0_29 = arith.constant 0 : index
    %c0_30 = arith.constant 0 : index
    %91 = vector.load %arg1[%c0, %c0_29, %c0_30] : memref<2x4x256xf32, #tpu.memory_space<vmem>>, vector<1x4x256xf32>
    %92 = vector.shape_cast %91 : vector<1x4x256xf32> to vector<4x256xf32>
    %cst_31 = arith.constant 0.000000e+00 : f32
    %93 = vector.broadcast %cst_31 : f32 to vector<4x256xf32>
    %94 = vector.extract_strided_slice %92 {offsets = [0, 252], sizes = [4, 4], strides = [1, 1]} : vector<4x256xf32> to vector<4x4xf32>
    %95 = vector.extract_strided_slice %92 {offsets = [0, 0], sizes = [4, 252], strides = [1, 1]} : vector<4x256xf32> to vector<4x252xf32>
    %96 = tpu.concatenate %94, %95 in 1 : vector<4x4xf32>, vector<4x252xf32> -> vector<4x256xf32>
    %97 = vector.extract_strided_slice %92 {offsets = [0, 12], sizes = [4, 244], strides = [1, 1]} : vector<4x256xf32> to vector<4x244xf32>
    %98 = vector.extract_strided_slice %92 {offsets = [0, 0], sizes = [4, 12], strides = [1, 1]} : vector<4x256xf32> to vector<4x12xf32>
    %99 = tpu.concatenate %97, %98 in 1 : vector<4x244xf32>, vector<4x12xf32> -> vector<4x256xf32>
    %100 = arith.select %25, %96, %99 : vector<4x256xi1>, vector<4x256xf32>
    %c0_32 = arith.constant 0 : index
    %c0_33 = arith.constant 0 : index
    %c0_34 = arith.constant 0 : index
    %101 = vector.load %arg2[%c0_32, %c0_33, %c0_34] : memref<9x4x4xf32, #tpu.memory_space<vmem>>, vector<1x4x4xf32>
    %102 = vector.shape_cast %101 : vector<1x4x4xf32> to vector<4x4xf32>
    %cst_35 = arith.constant dense<0.000000e+00> : vector<4x256xf32>
    %103 = tpu.matmul %102, %100, %cst_35 {dimension_numbers = #tpu.dot_dimension_numbers<[1], [0], [0], [1], [0, 0, 1, 1], [], []>} : vector<4x4xf32>, vector<4x256xf32>, vector<4x256xf32> -> vector<4x256xf32>
    %104 = arith.addf %93, %103 : vector<4x256xf32>
    %105 = vector.extract_strided_slice %92 {offsets = [0, 253], sizes = [4, 3], strides = [1, 1]} : vector<4x256xf32> to vector<4x3xf32>
    %106 = vector.extract_strided_slice %92 {offsets = [0, 0], sizes = [4, 253], strides = [1, 1]} : vector<4x256xf32> to vector<4x253xf32>
    %107 = tpu.concatenate %105, %106 in 1 : vector<4x3xf32>, vector<4x253xf32> -> vector<4x256xf32>
    %108 = vector.extract_strided_slice %92 {offsets = [0, 13], sizes = [4, 243], strides = [1, 1]} : vector<4x256xf32> to vector<4x243xf32>
    %109 = vector.extract_strided_slice %92 {offsets = [0, 0], sizes = [4, 13], strides = [1, 1]} : vector<4x256xf32> to vector<4x13xf32>
    %110 = tpu.concatenate %108, %109 in 1 : vector<4x243xf32>, vector<4x13xf32> -> vector<4x256xf32>
    %111 = arith.select %34, %107, %110 : vector<4x256xi1>, vector<4x256xf32>
    %c1 = arith.constant 1 : index
    %c0_36 = arith.constant 0 : index
    %c0_37 = arith.constant 0 : index
    %112 = vector.load %arg2[%c1, %c0_36, %c0_37] : memref<9x4x4xf32, #tpu.memory_space<vmem>>, vector<1x4x4xf32>
    %113 = vector.shape_cast %112 : vector<1x4x4xf32> to vector<4x4xf32>
    %cst_38 = arith.constant dense<0.000000e+00> : vector<4x256xf32>
    %114 = tpu.matmul %113, %111, %cst_38 {dimension_numbers = #tpu.dot_dimension_numbers<[1], [0], [0], [1], [0, 0, 1, 1], [], []>} : vector<4x4xf32>, vector<4x256xf32>, vector<4x256xf32> -> vector<4x256xf32>
    %115 = arith.addf %104, %114 : vector<4x256xf32>
    %116 = vector.extract_strided_slice %92 {offsets = [0, 254], sizes = [4, 2], strides = [1, 1]} : vector<4x256xf32> to vector<4x2xf32>
    %117 = vector.extract_strided_slice %92 {offsets = [0, 0], sizes = [4, 254], strides = [1, 1]} : vector<4x256xf32> to vector<4x254xf32>
    %118 = tpu.concatenate %116, %117 in 1 : vector<4x2xf32>, vector<4x254xf32> -> vector<4x256xf32>
    %119 = vector.extract_strided_slice %92 {offsets = [0, 14], sizes = [4, 242], strides = [1, 1]} : vector<4x256xf32> to vector<4x242xf32>
    %120 = vector.extract_strided_slice %92 {offsets = [0, 0], sizes = [4, 14], strides = [1, 1]} : vector<4x256xf32> to vector<4x14xf32>
    %121 = tpu.concatenate %119, %120 in 1 : vector<4x242xf32>, vector<4x14xf32> -> vector<4x256xf32>
    %122 = arith.select %43, %118, %121 : vector<4x256xi1>, vector<4x256xf32>
    %c2 = arith.constant 2 : index
    %c0_39 = arith.constant 0 : index
    %c0_40 = arith.constant 0 : index
    %123 = vector.load %arg2[%c2, %c0_39, %c0_40] : memref<9x4x4xf32, #tpu.memory_space<vmem>>, vector<1x4x4xf32>
    %124 = vector.shape_cast %123 : vector<1x4x4xf32> to vector<4x4xf32>
    %cst_41 = arith.constant dense<0.000000e+00> : vector<4x256xf32>
    %125 = tpu.matmul %124, %122, %cst_41 {dimension_numbers = #tpu.dot_dimension_numbers<[1], [0], [0], [1], [0, 0, 1, 1], [], []>} : vector<4x4xf32>, vector<4x256xf32>, vector<4x256xf32> -> vector<4x256xf32>
    %126 = arith.addf %115, %125 : vector<4x256xf32>
    %127 = vector.extract_strided_slice %92 {offsets = [0, 255], sizes = [4, 1], strides = [1, 1]} : vector<4x256xf32> to vector<4x1xf32>
    %128 = vector.extract_strided_slice %92 {offsets = [0, 0], sizes = [4, 255], strides = [1, 1]} : vector<4x256xf32> to vector<4x255xf32>
    %129 = tpu.concatenate %127, %128 in 1 : vector<4x1xf32>, vector<4x255xf32> -> vector<4x256xf32>
    %130 = vector.extract_strided_slice %92 {offsets = [0, 15], sizes = [4, 241], strides = [1, 1]} : vector<4x256xf32> to vector<4x241xf32>
    %131 = vector.extract_strided_slice %92 {offsets = [0, 0], sizes = [4, 15], strides = [1, 1]} : vector<4x256xf32> to vector<4x15xf32>
    %132 = tpu.concatenate %130, %131 in 1 : vector<4x241xf32>, vector<4x15xf32> -> vector<4x256xf32>
    %133 = arith.select %52, %129, %132 : vector<4x256xi1>, vector<4x256xf32>
    %c3 = arith.constant 3 : index
    %c0_42 = arith.constant 0 : index
    %c0_43 = arith.constant 0 : index
    %134 = vector.load %arg2[%c3, %c0_42, %c0_43] : memref<9x4x4xf32, #tpu.memory_space<vmem>>, vector<1x4x4xf32>
    %135 = vector.shape_cast %134 : vector<1x4x4xf32> to vector<4x4xf32>
    %cst_44 = arith.constant dense<0.000000e+00> : vector<4x256xf32>
    %136 = tpu.matmul %135, %133, %cst_44 {dimension_numbers = #tpu.dot_dimension_numbers<[1], [0], [0], [1], [0, 0, 1, 1], [], []>} : vector<4x4xf32>, vector<4x256xf32>, vector<4x256xf32> -> vector<4x256xf32>
    %137 = arith.addf %126, %136 : vector<4x256xf32>
    %c4 = arith.constant 4 : index
    %c0_45 = arith.constant 0 : index
    %c0_46 = arith.constant 0 : index
    %138 = vector.load %arg2[%c4, %c0_45, %c0_46] : memref<9x4x4xf32, #tpu.memory_space<vmem>>, vector<1x4x4xf32>
    %139 = vector.shape_cast %138 : vector<1x4x4xf32> to vector<4x4xf32>
    %cst_47 = arith.constant dense<0.000000e+00> : vector<4x256xf32>
    %140 = tpu.matmul %139, %92, %cst_47 {dimension_numbers = #tpu.dot_dimension_numbers<[1], [0], [0], [1], [0, 0, 1, 1], [], []>} : vector<4x4xf32>, vector<4x256xf32>, vector<4x256xf32> -> vector<4x256xf32>
    %141 = arith.addf %137, %140 : vector<4x256xf32>
    %142 = vector.extract_strided_slice %92 {offsets = [0, 1], sizes = [4, 255], strides = [1, 1]} : vector<4x256xf32> to vector<4x255xf32>
    %143 = vector.extract_strided_slice %92 {offsets = [0, 0], sizes = [4, 1], strides = [1, 1]} : vector<4x256xf32> to vector<4x1xf32>
    %144 = tpu.concatenate %142, %143 in 1 : vector<4x255xf32>, vector<4x1xf32> -> vector<4x256xf32>
    %145 = vector.extract_strided_slice %92 {offsets = [0, 241], sizes = [4, 15], strides = [1, 1]} : vector<4x256xf32> to vector<4x15xf32>
    %146 = vector.extract_strided_slice %92 {offsets = [0, 0], sizes = [4, 241], strides = [1, 1]} : vector<4x256xf32> to vector<4x241xf32>
    %147 = tpu.concatenate %145, %146 in 1 : vector<4x15xf32>, vector<4x241xf32> -> vector<4x256xf32>
    %148 = arith.select %61, %144, %147 : vector<4x256xi1>, vector<4x256xf32>
    %c5 = arith.constant 5 : index
    %c0_48 = arith.constant 0 : index
    %c0_49 = arith.constant 0 : index
    %149 = vector.load %arg2[%c5, %c0_48, %c0_49] : memref<9x4x4xf32, #tpu.memory_space<vmem>>, vector<1x4x4xf32>
    %150 = vector.shape_cast %149 : vector<1x4x4xf32> to vector<4x4xf32>
    %cst_50 = arith.constant dense<0.000000e+00> : vector<4x256xf32>
    %151 = tpu.matmul %150, %148, %cst_50 {dimension_numbers = #tpu.dot_dimension_numbers<[1], [0], [0], [1], [0, 0, 1, 1], [], []>} : vector<4x4xf32>, vector<4x256xf32>, vector<4x256xf32> -> vector<4x256xf32>
    %152 = arith.addf %141, %151 : vector<4x256xf32>
    %153 = vector.extract_strided_slice %92 {offsets = [0, 2], sizes = [4, 254], strides = [1, 1]} : vector<4x256xf32> to vector<4x254xf32>
    %154 = vector.extract_strided_slice %92 {offsets = [0, 0], sizes = [4, 2], strides = [1, 1]} : vector<4x256xf32> to vector<4x2xf32>
    %155 = tpu.concatenate %153, %154 in 1 : vector<4x254xf32>, vector<4x2xf32> -> vector<4x256xf32>
    %156 = vector.extract_strided_slice %92 {offsets = [0, 242], sizes = [4, 14], strides = [1, 1]} : vector<4x256xf32> to vector<4x14xf32>
    %157 = vector.extract_strided_slice %92 {offsets = [0, 0], sizes = [4, 242], strides = [1, 1]} : vector<4x256xf32> to vector<4x242xf32>
    %158 = tpu.concatenate %156, %157 in 1 : vector<4x14xf32>, vector<4x242xf32> -> vector<4x256xf32>
    %159 = arith.select %70, %155, %158 : vector<4x256xi1>, vector<4x256xf32>
    %c6 = arith.constant 6 : index
    %c0_51 = arith.constant 0 : index
    %c0_52 = arith.constant 0 : index
    %160 = vector.load %arg2[%c6, %c0_51, %c0_52] : memref<9x4x4xf32, #tpu.memory_space<vmem>>, vector<1x4x4xf32>
    %161 = vector.shape_cast %160 : vector<1x4x4xf32> to vector<4x4xf32>
    %cst_53 = arith.constant dense<0.000000e+00> : vector<4x256xf32>
    %162 = tpu.matmul %161, %159, %cst_53 {dimension_numbers = #tpu.dot_dimension_numbers<[1], [0], [0], [1], [0, 0, 1, 1], [], []>} : vector<4x4xf32>, vector<4x256xf32>, vector<4x256xf32> -> vector<4x256xf32>
    %163 = arith.addf %152, %162 : vector<4x256xf32>
    %164 = vector.extract_strided_slice %92 {offsets = [0, 3], sizes = [4, 253], strides = [1, 1]} : vector<4x256xf32> to vector<4x253xf32>
    %165 = vector.extract_strided_slice %92 {offsets = [0, 0], sizes = [4, 3], strides = [1, 1]} : vector<4x256xf32> to vector<4x3xf32>
    %166 = tpu.concatenate %164, %165 in 1 : vector<4x253xf32>, vector<4x3xf32> -> vector<4x256xf32>
    %167 = vector.extract_strided_slice %92 {offsets = [0, 243], sizes = [4, 13], strides = [1, 1]} : vector<4x256xf32> to vector<4x13xf32>
    %168 = vector.extract_strided_slice %92 {offsets = [0, 0], sizes = [4, 243], strides = [1, 1]} : vector<4x256xf32> to vector<4x243xf32>
    %169 = tpu.concatenate %167, %168 in 1 : vector<4x13xf32>, vector<4x243xf32> -> vector<4x256xf32>
    %170 = arith.select %79, %166, %169 : vector<4x256xi1>, vector<4x256xf32>
    %c7 = arith.constant 7 : index
    %c0_54 = arith.constant 0 : index
    %c0_55 = arith.constant 0 : index
    %171 = vector.load %arg2[%c7, %c0_54, %c0_55] : memref<9x4x4xf32, #tpu.memory_space<vmem>>, vector<1x4x4xf32>
    %172 = vector.shape_cast %171 : vector<1x4x4xf32> to vector<4x4xf32>
    %cst_56 = arith.constant dense<0.000000e+00> : vector<4x256xf32>
    %173 = tpu.matmul %172, %170, %cst_56 {dimension_numbers = #tpu.dot_dimension_numbers<[1], [0], [0], [1], [0, 0, 1, 1], [], []>} : vector<4x4xf32>, vector<4x256xf32>, vector<4x256xf32> -> vector<4x256xf32>
    %174 = arith.addf %163, %173 : vector<4x256xf32>
    %175 = vector.extract_strided_slice %92 {offsets = [0, 4], sizes = [4, 252], strides = [1, 1]} : vector<4x256xf32> to vector<4x252xf32>
    %176 = vector.extract_strided_slice %92 {offsets = [0, 0], sizes = [4, 4], strides = [1, 1]} : vector<4x256xf32> to vector<4x4xf32>
    %177 = tpu.concatenate %175, %176 in 1 : vector<4x252xf32>, vector<4x4xf32> -> vector<4x256xf32>
    %178 = vector.extract_strided_slice %92 {offsets = [0, 244], sizes = [4, 12], strides = [1, 1]} : vector<4x256xf32> to vector<4x12xf32>
    %179 = vector.extract_strided_slice %92 {offsets = [0, 0], sizes = [4, 244], strides = [1, 1]} : vector<4x256xf32> to vector<4x244xf32>
    %180 = tpu.concatenate %178, %179 in 1 : vector<4x12xf32>, vector<4x244xf32> -> vector<4x256xf32>
    %181 = arith.select %88, %177, %180 : vector<4x256xi1>, vector<4x256xf32>
    %c8 = arith.constant 8 : index
    %c0_57 = arith.constant 0 : index
    %c0_58 = arith.constant 0 : index
    %182 = vector.load %arg2[%c8, %c0_57, %c0_58] : memref<9x4x4xf32, #tpu.memory_space<vmem>>, vector<1x4x4xf32>
    %183 = vector.shape_cast %182 : vector<1x4x4xf32> to vector<4x4xf32>
    %cst_59 = arith.constant dense<0.000000e+00> : vector<4x256xf32>
    %184 = tpu.matmul %183, %181, %cst_59 {dimension_numbers = #tpu.dot_dimension_numbers<[1], [0], [0], [1], [0, 0, 1, 1], [], []>} : vector<4x4xf32>, vector<4x256xf32>, vector<4x256xf32> -> vector<4x256xf32>
    %185 = arith.addf %174, %184 : vector<4x256xf32>
    %c0_60 = arith.constant 0 : index
    %c0_61 = arith.constant 0 : index
    %c0_62 = arith.constant 0 : index
    %186 = vector.load %arg6[%c0_60, %c0_61, %c0_62] : memref<2x4x256xf32, #tpu.memory_space<vmem>>, vector<1x4x256xf32>
    %187 = vector.shape_cast %186 : vector<1x4x256xf32> to vector<4x256xf32>
    %188 = vector.shape_cast %185 : vector<4x256xf32> to vector<1x4x256xf32>
    tpu.vector_store %arg6[%c0_60, %c0_61, %c0_62], %188 {strides = array<i32>} : memref<2x4x256xf32, #tpu.memory_space<vmem>>, vector<1x4x256xf32>,
    %cst_63 = arith.constant dense<0.000000e+00> : vector<4xf32>
    %189 = vector.multi_reduction <add>, %185, %cst_63 [1] : vector<4x256xf32> to vector<4xf32>
    %190 = vector.shape_cast %189 : vector<4xf32> to vector<4x1xf32>
    %191 = arith.addf %89, %190 : vector<4x1xf32>
    %192 = arith.mulf %185, %185 : vector<4x256xf32>
    %cst_64 = arith.constant dense<0.000000e+00> : vector<4xf32>
    %193 = vector.multi_reduction <add>, %192, %cst_64 [1] : vector<4x256xf32> to vector<4xf32>
    %194 = vector.shape_cast %193 : vector<4xf32> to vector<4x1xf32>
    %195 = arith.addf %90, %194 : vector<4x1xf32>
    %c1_65 = arith.constant 1 : index
    %c0_66 = arith.constant 0 : index
    %c0_67 = arith.constant 0 : index
    %196 = vector.load %arg1[%c1_65, %c0_66, %c0_67] : memref<2x4x256xf32, #tpu.memory_space<vmem>>, vector<1x4x256xf32>
    %197 = vector.shape_cast %196 : vector<1x4x256xf32> to vector<4x256xf32>
    %cst_68 = arith.constant 0.000000e+00 : f32
    %198 = vector.broadcast %cst_68 : f32 to vector<4x256xf32>
    %199 = vector.extract_strided_slice %197 {offsets = [0, 252], sizes = [4, 4], strides = [1, 1]} : vector<4x256xf32> to vector<4x4xf32>
    %200 = vector.extract_strided_slice %197 {offsets = [0, 0], sizes = [4, 252], strides = [1, 1]} : vector<4x256xf32> to vector<4x252xf32>
    %201 = tpu.concatenate %199, %200 in 1 : vector<4x4xf32>, vector<4x252xf32> -> vector<4x256xf32>
    %202 = vector.extract_strided_slice %197 {offsets = [0, 12], sizes = [4, 244], strides = [1, 1]} : vector<4x256xf32> to vector<4x244xf32>
    %203 = vector.extract_strided_slice %197 {offsets = [0, 0], sizes = [4, 12], strides = [1, 1]} : vector<4x256xf32> to vector<4x12xf32>
    %204 = tpu.concatenate %202, %203 in 1 : vector<4x244xf32>, vector<4x12xf32> -> vector<4x256xf32>
    %205 = arith.select %25, %201, %204 : vector<4x256xi1>, vector<4x256xf32>
    %c0_69 = arith.constant 0 : index
    %c0_70 = arith.constant 0 : index
    %c0_71 = arith.constant 0 : index
    %206 = vector.load %arg2[%c0_69, %c0_70, %c0_71] : memref<9x4x4xf32, #tpu.memory_space<vmem>>, vector<1x4x4xf32>
    %207 = vector.shape_cast %206 : vector<1x4x4xf32> to vector<4x4xf32>
    %cst_72 = arith.constant dense<0.000000e+00> : vector<4x256xf32>
    %208 = tpu.matmul %207, %205, %cst_72 {dimension_numbers = #tpu.dot_dimension_numbers<[1], [0], [0], [1], [0, 0, 1, 1], [], []>} : vector<4x4xf32>, vector<4x256xf32>, vector<4x256xf32> -> vector<4x256xf32>
    %209 = arith.addf %198, %208 : vector<4x256xf32>
    %210 = vector.extract_strided_slice %197 {offsets = [0, 253], sizes = [4, 3], strides = [1, 1]} : vector<4x256xf32> to vector<4x3xf32>
    %211 = vector.extract_strided_slice %197 {offsets = [0, 0], sizes = [4, 253], strides = [1, 1]} : vector<4x256xf32> to vector<4x253xf32>
    %212 = tpu.concatenate %210, %211 in 1 : vector<4x3xf32>, vector<4x253xf32> -> vector<4x256xf32>
    %213 = vector.extract_strided_slice %197 {offsets = [0, 13], sizes = [4, 243], strides = [1, 1]} : vector<4x256xf32> to vector<4x243xf32>
    %214 = vector.extract_strided_slice %197 {offsets = [0, 0], sizes = [4, 13], strides = [1, 1]} : vector<4x256xf32> to vector<4x13xf32>
    %215 = tpu.concatenate %213, %214 in 1 : vector<4x243xf32>, vector<4x13xf32> -> vector<4x256xf32>
    %216 = arith.select %34, %212, %215 : vector<4x256xi1>, vector<4x256xf32>
    %c1_73 = arith.constant 1 : index
    %c0_74 = arith.constant 0 : index
    %c0_75 = arith.constant 0 : index
    %217 = vector.load %arg2[%c1_73, %c0_74, %c0_75] : memref<9x4x4xf32, #tpu.memory_space<vmem>>, vector<1x4x4xf32>
    %218 = vector.shape_cast %217 : vector<1x4x4xf32> to vector<4x4xf32>
    %cst_76 = arith.constant dense<0.000000e+00> : vector<4x256xf32>
    %219 = tpu.matmul %218, %216, %cst_76 {dimension_numbers = #tpu.dot_dimension_numbers<[1], [0], [0], [1], [0, 0, 1, 1], [], []>} : vector<4x4xf32>, vector<4x256xf32>, vector<4x256xf32> -> vector<4x256xf32>
    %220 = arith.addf %209, %219 : vector<4x256xf32>
    %221 = vector.extract_strided_slice %197 {offsets = [0, 254], sizes = [4, 2], strides = [1, 1]} : vector<4x256xf32> to vector<4x2xf32>
    %222 = vector.extract_strided_slice %197 {offsets = [0, 0], sizes = [4, 254], strides = [1, 1]} : vector<4x256xf32> to vector<4x254xf32>
    %223 = tpu.concatenate %221, %222 in 1 : vector<4x2xf32>, vector<4x254xf32> -> vector<4x256xf32>
    %224 = vector.extract_strided_slice %197 {offsets = [0, 14], sizes = [4, 242], strides = [1, 1]} : vector<4x256xf32> to vector<4x242xf32>
    %225 = vector.extract_strided_slice %197 {offsets = [0, 0], sizes = [4, 14], strides = [1, 1]} : vector<4x256xf32> to vector<4x14xf32>
    %226 = tpu.concatenate %224, %225 in 1 : vector<4x242xf32>, vector<4x14xf32> -> vector<4x256xf32>
    %227 = arith.select %43, %223, %226 : vector<4x256xi1>, vector<4x256xf32>
    %c2_77 = arith.constant 2 : index
    %c0_78 = arith.constant 0 : index
    %c0_79 = arith.constant 0 : index
    %228 = vector.load %arg2[%c2_77, %c0_78, %c0_79] : memref<9x4x4xf32, #tpu.memory_space<vmem>>, vector<1x4x4xf32>
    %229 = vector.shape_cast %228 : vector<1x4x4xf32> to vector<4x4xf32>
    %cst_80 = arith.constant dense<0.000000e+00> : vector<4x256xf32>
    %230 = tpu.matmul %229, %227, %cst_80 {dimension_numbers = #tpu.dot_dimension_numbers<[1], [0], [0], [1], [0, 0, 1, 1], [], []>} : vector<4x4xf32>, vector<4x256xf32>, vector<4x256xf32> -> vector<4x256xf32>
    %231 = arith.addf %220, %230 : vector<4x256xf32>
    %232 = vector.extract_strided_slice %197 {offsets = [0, 255], sizes = [4, 1], strides = [1, 1]} : vector<4x256xf32> to vector<4x1xf32>
    %233 = vector.extract_strided_slice %197 {offsets = [0, 0], sizes = [4, 255], strides = [1, 1]} : vector<4x256xf32> to vector<4x255xf32>
    %234 = tpu.concatenate %232, %233 in 1 : vector<4x1xf32>, vector<4x255xf32> -> vector<4x256xf32>
    %235 = vector.extract_strided_slice %197 {offsets = [0, 15], sizes = [4, 241], strides = [1, 1]} : vector<4x256xf32> to vector<4x241xf32>
    %236 = vector.extract_strided_slice %197 {offsets = [0, 0], sizes = [4, 15], strides = [1, 1]} : vector<4x256xf32> to vector<4x15xf32>
    %237 = tpu.concatenate %235, %236 in 1 : vector<4x241xf32>, vector<4x15xf32> -> vector<4x256xf32>
    %238 = arith.select %52, %234, %237 : vector<4x256xi1>, vector<4x256xf32>
    %c3_81 = arith.constant 3 : index
    %c0_82 = arith.constant 0 : index
    %c0_83 = arith.constant 0 : index
    %239 = vector.load %arg2[%c3_81, %c0_82, %c0_83] : memref<9x4x4xf32, #tpu.memory_space<vmem>>, vector<1x4x4xf32>
    %240 = vector.shape_cast %239 : vector<1x4x4xf32> to vector<4x4xf32>
    %cst_84 = arith.constant dense<0.000000e+00> : vector<4x256xf32>
    %241 = tpu.matmul %240, %238, %cst_84 {dimension_numbers = #tpu.dot_dimension_numbers<[1], [0], [0], [1], [0, 0, 1, 1], [], []>} : vector<4x4xf32>, vector<4x256xf32>, vector<4x256xf32> -> vector<4x256xf32>
    %242 = arith.addf %231, %241 : vector<4x256xf32>
    %c4_85 = arith.constant 4 : index
    %c0_86 = arith.constant 0 : index
    %c0_87 = arith.constant 0 : index
    %243 = vector.load %arg2[%c4_85, %c0_86, %c0_87] : memref<9x4x4xf32, #tpu.memory_space<vmem>>, vector<1x4x4xf32>
    %244 = vector.shape_cast %243 : vector<1x4x4xf32> to vector<4x4xf32>
    %cst_88 = arith.constant dense<0.000000e+00> : vector<4x256xf32>
    %245 = tpu.matmul %244, %197, %cst_88 {dimension_numbers = #tpu.dot_dimension_numbers<[1], [0], [0], [1], [0, 0, 1, 1], [], []>} : vector<4x4xf32>, vector<4x256xf32>, vector<4x256xf32> -> vector<4x256xf32>
    %246 = arith.addf %242, %245 : vector<4x256xf32>
    %247 = vector.extract_strided_slice %197 {offsets = [0, 1], sizes = [4, 255], strides = [1, 1]} : vector<4x256xf32> to vector<4x255xf32>
    %248 = vector.extract_strided_slice %197 {offsets = [0, 0], sizes = [4, 1], strides = [1, 1]} : vector<4x256xf32> to vector<4x1xf32>
    %249 = tpu.concatenate %247, %248 in 1 : vector<4x255xf32>, vector<4x1xf32> -> vector<4x256xf32>
    %250 = vector.extract_strided_slice %197 {offsets = [0, 241], sizes = [4, 15], strides = [1, 1]} : vector<4x256xf32> to vector<4x15xf32>
    %251 = vector.extract_strided_slice %197 {offsets = [0, 0], sizes = [4, 241], strides = [1, 1]} : vector<4x256xf32> to vector<4x241xf32>
    %252 = tpu.concatenate %250, %251 in 1 : vector<4x15xf32>, vector<4x241xf32> -> vector<4x256xf32>
    %253 = arith.select %61, %249, %252 : vector<4x256xi1>, vector<4x256xf32>
    %c5_89 = arith.constant 5 : index
    %c0_90 = arith.constant 0 : index
    %c0_91 = arith.constant 0 : index
    %254 = vector.load %arg2[%c5_89, %c0_90, %c0_91] : memref<9x4x4xf32, #tpu.memory_space<vmem>>, vector<1x4x4xf32>
    %255 = vector.shape_cast %254 : vector<1x4x4xf32> to vector<4x4xf32>
    %cst_92 = arith.constant dense<0.000000e+00> : vector<4x256xf32>
    %256 = tpu.matmul %255, %253, %cst_92 {dimension_numbers = #tpu.dot_dimension_numbers<[1], [0], [0], [1], [0, 0, 1, 1], [], []>} : vector<4x4xf32>, vector<4x256xf32>, vector<4x256xf32> -> vector<4x256xf32>
    %257 = arith.addf %246, %256 : vector<4x256xf32>
    %258 = vector.extract_strided_slice %197 {offsets = [0, 2], sizes = [4, 254], strides = [1, 1]} : vector<4x256xf32> to vector<4x254xf32>
    %259 = vector.extract_strided_slice %197 {offsets = [0, 0], sizes = [4, 2], strides = [1, 1]} : vector<4x256xf32> to vector<4x2xf32>
    %260 = tpu.concatenate %258, %259 in 1 : vector<4x254xf32>, vector<4x2xf32> -> vector<4x256xf32>
    %261 = vector.extract_strided_slice %197 {offsets = [0, 242], sizes = [4, 14], strides = [1, 1]} : vector<4x256xf32> to vector<4x14xf32>
    %262 = vector.extract_strided_slice %197 {offsets = [0, 0], sizes = [4, 242], strides = [1, 1]} : vector<4x256xf32> to vector<4x242xf32>
    %263 = tpu.concatenate %261, %262 in 1 : vector<4x14xf32>, vector<4x242xf32> -> vector<4x256xf32>
    %264 = arith.select %70, %260, %263 : vector<4x256xi1>, vector<4x256xf32>
    %c6_93 = arith.constant 6 : index
    %c0_94 = arith.constant 0 : index
    %c0_95 = arith.constant 0 : index
    %265 = vector.load %arg2[%c6_93, %c0_94, %c0_95] : memref<9x4x4xf32, #tpu.memory_space<vmem>>, vector<1x4x4xf32>
    %266 = vector.shape_cast %265 : vector<1x4x4xf32> to vector<4x4xf32>
    %cst_96 = arith.constant dense<0.000000e+00> : vector<4x256xf32>
    %267 = tpu.matmul %266, %264, %cst_96 {dimension_numbers = #tpu.dot_dimension_numbers<[1], [0], [0], [1], [0, 0, 1, 1], [], []>} : vector<4x4xf32>, vector<4x256xf32>, vector<4x256xf32> -> vector<4x256xf32>
    %268 = arith.addf %257, %267 : vector<4x256xf32>
    %269 = vector.extract_strided_slice %197 {offsets = [0, 3], sizes = [4, 253], strides = [1, 1]} : vector<4x256xf32> to vector<4x253xf32>
    %270 = vector.extract_strided_slice %197 {offsets = [0, 0], sizes = [4, 3], strides = [1, 1]} : vector<4x256xf32> to vector<4x3xf32>
    %271 = tpu.concatenate %269, %270 in 1 : vector<4x253xf32>, vector<4x3xf32> -> vector<4x256xf32>
    %272 = vector.extract_strided_slice %197 {offsets = [0, 243], sizes = [4, 13], strides = [1, 1]} : vector<4x256xf32> to vector<4x13xf32>
    %273 = vector.extract_strided_slice %197 {offsets = [0, 0], sizes = [4, 243], strides = [1, 1]} : vector<4x256xf32> to vector<4x243xf32>
    %274 = tpu.concatenate %272, %273 in 1 : vector<4x13xf32>, vector<4x243xf32> -> vector<4x256xf32>
    %275 = arith.select %79, %271, %274 : vector<4x256xi1>, vector<4x256xf32>
    %c7_97 = arith.constant 7 : index
    %c0_98 = arith.constant 0 : index
    %c0_99 = arith.constant 0 : index
    %276 = vector.load %arg2[%c7_97, %c0_98, %c0_99] : memref<9x4x4xf32, #tpu.memory_space<vmem>>, vector<1x4x4xf32>
    %277 = vector.shape_cast %276 : vector<1x4x4xf32> to vector<4x4xf32>
    %cst_100 = arith.constant dense<0.000000e+00> : vector<4x256xf32>
    %278 = tpu.matmul %277, %275, %cst_100 {dimension_numbers = #tpu.dot_dimension_numbers<[1], [0], [0], [1], [0, 0, 1, 1], [], []>} : vector<4x4xf32>, vector<4x256xf32>, vector<4x256xf32> -> vector<4x256xf32>
    %279 = arith.addf %268, %278 : vector<4x256xf32>
    %280 = vector.extract_strided_slice %197 {offsets = [0, 4], sizes = [4, 252], strides = [1, 1]} : vector<4x256xf32> to vector<4x252xf32>
    %281 = vector.extract_strided_slice %197 {offsets = [0, 0], sizes = [4, 4], strides = [1, 1]} : vector<4x256xf32> to vector<4x4xf32>
    %282 = tpu.concatenate %280, %281 in 1 : vector<4x252xf32>, vector<4x4xf32> -> vector<4x256xf32>
    %283 = vector.extract_strided_slice %197 {offsets = [0, 244], sizes = [4, 12], strides = [1, 1]} : vector<4x256xf32> to vector<4x12xf32>
    %284 = vector.extract_strided_slice %197 {offsets = [0, 0], sizes = [4, 244], strides = [1, 1]} : vector<4x256xf32> to vector<4x244xf32>
    %285 = tpu.concatenate %283, %284 in 1 : vector<4x12xf32>, vector<4x244xf32> -> vector<4x256xf32>
    %286 = arith.select %88, %282, %285 : vector<4x256xi1>, vector<4x256xf32>
    %c8_101 = arith.constant 8 : index
    %c0_102 = arith.constant 0 : index
    %c0_103 = arith.constant 0 : index
    %287 = vector.load %arg2[%c8_101, %c0_102, %c0_103] : memref<9x4x4xf32, #tpu.memory_space<vmem>>, vector<1x4x4xf32>
    %288 = vector.shape_cast %287 : vector<1x4x4xf32> to vector<4x4xf32>
    %cst_104 = arith.constant dense<0.000000e+00> : vector<4x256xf32>
    %289 = tpu.matmul %288, %286, %cst_104 {dimension_numbers = #tpu.dot_dimension_numbers<[1], [0], [0], [1], [0, 0, 1, 1], [], []>} : vector<4x4xf32>, vector<4x256xf32>, vector<4x256xf32> -> vector<4x256xf32>
    %290 = arith.addf %279, %289 : vector<4x256xf32>
    %c1_105 = arith.constant 1 : index
    %c0_106 = arith.constant 0 : index
    %c0_107 = arith.constant 0 : index
    %291 = vector.load %arg6[%c1_105, %c0_106, %c0_107] : memref<2x4x256xf32, #tpu.memory_space<vmem>>, vector<1x4x256xf32>
    %292 = vector.shape_cast %291 : vector<1x4x256xf32> to vector<4x256xf32>
    %293 = vector.shape_cast %290 : vector<4x256xf32> to vector<1x4x256xf32>
    tpu.vector_store %arg6[%c1_105, %c0_106, %c0_107], %293 {strides = array<i32>} : memref<2x4x256xf32, #tpu.memory_space<vmem>>, vector<1x4x256xf32>,
    %cst_108 = arith.constant dense<0.000000e+00> : vector<4xf32>
    %294 = vector.multi_reduction <add>, %290, %cst_108 [1] : vector<4x256xf32> to vector<4xf32>
    %295 = vector.shape_cast %294 : vector<4xf32> to vector<4x1xf32>
    %296 = arith.addf %191, %295 : vector<4x1xf32>
    %297 = arith.mulf %290, %290 : vector<4x256xf32>
    %cst_109 = arith.constant dense<0.000000e+00> : vector<4xf32>
    %298 = vector.multi_reduction <add>, %297, %cst_109 [1] : vector<4x256xf32> to vector<4xf32>
    %299 = vector.shape_cast %298 : vector<4xf32> to vector<4x1xf32>
    %300 = arith.addf %195, %299 : vector<4x1xf32>
    %cst_110 = arith.constant 0.001953125 : f32
    %301 = vector.broadcast %cst_110 : f32 to vector<4x1xf32>
    %302 = arith.mulf %296, %301 : vector<4x1xf32>
    %cst_111 = arith.constant 0.001953125 : f32
    %303 = vector.broadcast %cst_111 : f32 to vector<4x1xf32>
    %304 = arith.mulf %300, %303 : vector<4x1xf32>
    %305 = arith.mulf %302, %302 : vector<4x1xf32>
    %306 = arith.subf %304, %305 : vector<4x1xf32>
    %cst_112 = arith.constant 0.000000e+00 : f32
    %307 = vector.broadcast %cst_112 : f32 to vector<4x1xf32>
    %308 = arith.maximumf %306, %307 : vector<4x1xf32>
    %cst_113 = arith.constant 9.99999974E-6 : f32
    %309 = vector.broadcast %cst_113 : f32 to vector<4x1xf32>
    %310 = arith.addf %308, %309 : vector<4x1xf32>
    %311 = math.rsqrt %310 : vector<4x1xf32>
    %c0_114 = arith.constant 0 : index
    %c0_115 = arith.constant 0 : index
    %312 = vector.load %arg3[%c0_114, %c0_115] : memref<4x1xf32, #tpu.memory_space<vmem>>, vector<4x1xf32>
    %313 = arith.mulf %311, %312 : vector<4x1xf32>
    %c0_116 = arith.constant 0 : index
    %c0_117 = arith.constant 0 : index
    %314 = vector.load %arg4[%c0_116, %c0_117] : memref<4x1xf32, #tpu.memory_space<vmem>>, vector<4x1xf32>
    %315 = arith.mulf %302, %313 : vector<4x1xf32>
    %316 = arith.subf %314, %315 : vector<4x1xf32>
    %c0_118 = arith.constant 0 : index
    %c0_119 = arith.constant 0 : index
    %c0_120 = arith.constant 0 : index
    %317 = vector.load %arg6[%c0_118, %c0_119, %c0_120] : memref<2x4x256xf32, #tpu.memory_space<vmem>>, vector<1x4x256xf32>
    %318 = vector.shape_cast %317 : vector<1x4x256xf32> to vector<4x256xf32>
    %319 = vector.broadcast %313 : vector<4x1xf32> to vector<4x256xf32>
    %320 = arith.mulf %318, %319 : vector<4x256xf32>
    %321 = vector.broadcast %316 : vector<4x1xf32> to vector<4x256xf32>
    %322 = arith.addf %320, %321 : vector<4x256xf32>
    %cst_121 = arith.constant 0.000000e+00 : f32
    %323 = vector.broadcast %cst_121 : f32 to vector<4x256xf32>
    %324 = arith.cmpf oge, %322, %323 : vector<4x256xf32>
    %cst_122 = arith.constant 0.00999999977 : f32
    %325 = vector.broadcast %cst_122 : f32 to vector<4x256xf32>
    %326 = arith.mulf %325, %322 : vector<4x256xf32>
    %327 = arith.select %324, %322, %326 : vector<4x256xi1>, vector<4x256xf32>
    %c0_123 = arith.constant 0 : index
    %c0_124 = arith.constant 0 : index
    %c0_125 = arith.constant 0 : index
    %328 = vector.load %arg5[%c0_123, %c0_124, %c0_125] : memref<2x4x256xf32, #tpu.memory_space<vmem>>, vector<1x4x256xf32>
    %329 = vector.shape_cast %328 : vector<1x4x256xf32> to vector<4x256xf32>
    %330 = vector.shape_cast %327 : vector<4x256xf32> to vector<1x4x256xf32>
    tpu.vector_store %arg5[%c0_123, %c0_124, %c0_125], %330 {strides = array<i32>} : memref<2x4x256xf32, #tpu.memory_space<vmem>>, vector<1x4x256xf32>,
    %c1_126 = arith.constant 1 : index
    %c0_127 = arith.constant 0 : index
    %c0_128 = arith.constant 0 : index
    %331 = vector.load %arg6[%c1_126, %c0_127, %c0_128] : memref<2x4x256xf32, #tpu.memory_space<vmem>>, vector<1x4x256xf32>
    %332 = vector.shape_cast %331 : vector<1x4x256xf32> to vector<4x256xf32>
    %333 = vector.broadcast %313 : vector<4x1xf32> to vector<4x256xf32>
    %334 = arith.mulf %332, %333 : vector<4x256xf32>
    %335 = vector.broadcast %316 : vector<4x1xf32> to vector<4x256xf32>
    %336 = arith.addf %334, %335 : vector<4x256xf32>
    %cst_129 = arith.constant 0.000000e+00 : f32
    %337 = vector.broadcast %cst_129 : f32 to vector<4x256xf32>
    %338 = arith.cmpf oge, %336, %337 : vector<4x256xf32>
    %cst_130 = arith.constant 0.00999999977 : f32
    %339 = vector.broadcast %cst_130 : f32 to vector<4x256xf32>
    %340 = arith.mulf %339, %336 : vector<4x256xf32>
    %341 = arith.select %338, %336, %340 : vector<4x256xi1>, vector<4x256xf32>
    %c1_131 = arith.constant 1 : index
    %c0_132 = arith.constant 0 : index
    %c0_133 = arith.constant 0 : index
    %342 = vector.load %arg5[%c1_131, %c0_132, %c0_133] : memref<2x4x256xf32, #tpu.memory_space<vmem>>, vector<1x4x256xf32>
    %343 = vector.shape_cast %342 : vector<1x4x256xf32> to vector<4x256xf32>
    %344 = vector.shape_cast %341 : vector<4x256xf32> to vector<1x4x256xf32>
    tpu.vector_store %arg5[%c1_131, %c0_132, %c0_133], %344 {strides = array<i32>} : memref<2x4x256xf32, #tpu.memory_space<vmem>>, vector<1x4x256xf32>,
    return
  }
  func.func @transform_0(%arg0: i32) -> (i32, i32, i32) {
    %c0_i32 = arith.constant 0 : i32
    %c0_i32_0 = arith.constant 0 : i32
    %c0_i32_1 = arith.constant 0 : i32
    %c0_i32_2 = arith.constant 0 : i32
    return %c0_i32, %c0_i32_0, %c0_i32_1 : i32, i32, i32
  }
  func.func @transform_1(%arg0: i32) -> (i32, i32, i32) {
    %c0_i32 = arith.constant 0 : i32
    %c0_i32_0 = arith.constant 0 : i32
    %c0_i32_1 = arith.constant 0 : i32
    return %c0_i32, %arg0, %c0_i32_0 : i32, i32, i32
  }
  func.func @transform_2(%arg0: i32) -> (i32, i32) {
    %c0_i32 = arith.constant 0 : i32
    %c0_i32_0 = arith.constant 0 : i32
    return %arg0, %c0_i32 : i32, i32
  }
  func.func @transform_3(%arg0: i32) -> (i32, i32) {
    %c0_i32 = arith.constant 0 : i32
    %c0_i32_0 = arith.constant 0 : i32
    return %arg0, %c0_i32 : i32, i32
  }
  func.func @transform_4(%arg0: i32) -> (i32, i32, i32) {
    %c0_i32 = arith.constant 0 : i32
    %c0_i32_0 = arith.constant 0 : i32
    %c0_i32_1 = arith.constant 0 : i32
    return %c0_i32, %arg0, %c0_i32_0 : i32, i32, i32
  }
}

</mosaic_0001>

<llo_original>
// kernel: tpu_custom_call.1
$region0: #{tpu_custom_call.1}
  #allocation0 [shape = 'u32[]', space=smem, size = 0x4, offset = 0x4, fixed_abs, tag = 'smem constant byte address 0x4 - core index']
  #allocation1 [shape = 'u32[144,128]{1,0:T(1,128)}', space=vmem, size = 0x12000, scoped, tag = 'internal scratch']
  #allocation2 [shape = 'f32[2,4,256]{2,1,0:T(4,128)}', space=vmem, size = 0x2000, scoped, tag = 'scratch operand']
  %s0 = inlined_call_operand.vmem [shape: f32[2,4,256], index: 0, kind: input, shape index: {}]
  %s1 = inlined_call_operand.vmem [shape: f32[9,4,4], index: 1, kind: input, shape index: {}]
  %s2 = inlined_call_operand.vmem [shape: f32[4,1], index: 2, kind: input, shape index: {}]
  %s3 = inlined_call_operand.vmem [shape: f32[4,1], index: 3, kind: input, shape index: {}]
  %s4 = inlined_call_operand.hbm [shape: f32[2,4,256], index: 4, kind: output, shape index: {}]
  %s5 = sld [smem:[#allocation0]]
  $region26: #{tpu_custom_call.1} parent=0
    _
  %s7 = ssub.s32 1, %s5
  %s8 = scalar_select 0, %s7, %s5
  $region1: #{tpu_custom_call.1} parent=0
    #allocation3 [shape = 'u8[8192]{0}', space=vmem, size = 0x2000, scoped, tag = 'output window, operand 0, single buffered']
    #allocation4 [shape = 's32[1]{0}', space=sflag, size = 0x4, scoped, tag = 'scoped memory for tpu_custom_call.1']
    %9 = vsyncpa [#allocation4], 0
    // Predicated region
    $region2: #{tpu_custom_call.1} parent=1 // pred_check
      _
    $region3: #{tpu_custom_call.1} parent=1 // pred_check_branch
      %11 = sbr.rel (0) target = $region5
    $region4: #{tpu_custom_call.1} parent=1 // pred_region
      _
    $region5: #{tpu_custom_call.1} parent=1 // pred_fallthru
      _
    // Predicated region
    $region6: #{tpu_custom_call.1} parent=1 // pred_check
      _
    $region7: #{tpu_custom_call.1} parent=1 // pred_check_branch
      %13 = sbr.rel (0) target = $region9
    $region8: #{tpu_custom_call.1} parent=1 // pred_region
      _
    $region9: #{tpu_custom_call.1} parent=1 // pred_fallthru
      _
    // Predicated region
    $region10: #{tpu_custom_call.1} parent=1 // pred_check
      _
    $region11: #{tpu_custom_call.1} parent=1 // pred_check_branch
      %15 = sbr.rel (0) target = $region13
    $region12: #{tpu_custom_call.1} parent=1 // pred_region
      _
    $region13: #{tpu_custom_call.1} parent=1 // pred_fallthru
      _
    // Predicated region
    $region14: #{tpu_custom_call.1} parent=1 // pred_check
      _
    $region15: #{tpu_custom_call.1} parent=1 // pred_check_branch
      %17 = sbr.rel (0) target = $region17
    $region16: #{tpu_custom_call.1} parent=1 // pred_region
      _
    $region17: #{tpu_custom_call.1} parent=1 // pred_fallthru
      _
    %v18 = vlaneseq
    %v19 = vand.u32 %v18, 127
    %v20 = vadd.s32 %v19, 128
    %vm21 = vcmp.lt.s32.totalorder %v19, 0
    %v22 = vsub.s32 0, %v19
    %v23 = vsel %vm21, %v22, %v19
    %v24 = vshrl.u32 %v23, 4
    %v25 = vand.u32 %v23, 15
    %v26 = vsub.s32 0, %v25
    %v27 = vsel %vm21, %v26, %v25
    %vm28 = vcmp.lt.s32.totalorder %v20, 0
    %v29 = vsub.s32 0, %v20
    %v30 = vsel %vm28, %v29, %v20
    %v31 = vshrl.u32 %v30, 4
    %v32 = vand.u32 %v30, 15
    %v33 = vsub.s32 0, %v32
    %v34 = vsel %vm28, %v33, %v32
    %vm35 = vcmp.ne.s32.totalorder %v27, 0
    %vm36 = vcmp.ne.s32.totalorder %v34, 0
    %vm37 = vcmp.lt.s32.totalorder %v27, 0
    %vm38 = vcmp.lt.s32.totalorder %v34, 0
    %vm39 = vmand %vm37, %vm35
    %vm40 = vmand %vm38, %vm36
    %v41 = vadd.s32 %v27, 16
    %v42 = vadd.s32 %v34, 16
    %v43 = vsel %vm39, %v41, %v27
    %v44 = vsel %vm40, %v42, %v34
    %v45 = vadd.s32 %v43, 4294967292
    %v46 = vadd.s32 %v44, 4294967292
    %vm47 = vcmp.ge.s32.totalorder %v45, 0
    %vm48 = vcmp.ge.s32.totalorder %v46, 0
    %vm49 = vcmp.lt.s32.totalorder %v45, 16
    %vm50 = vcmp.lt.s32.totalorder %v46, 16
    %vm51 = vmand %vm47, %vm49
    %vm52 = vmand %vm48, %vm50
    %v53 = vadd.s32 %v43, 4294967293
    %v54 = vadd.s32 %v44, 4294967293
    %vm55 = vcmp.ge.s32.totalorder %v53, 0
    %vm56 = vcmp.ge.s32.totalorder %v54, 0
    %vm57 = vcmp.lt.s32.totalorder %v53, 16
    %vm58 = vcmp.lt.s32.totalorder %v54, 16
    %vm59 = vmand %vm55, %vm57
    %vm60 = vmand %vm56, %vm58
    %v61 = vadd.s32 %v43, 4294967294
    %v62 = vadd.s32 %v44, 4294967294
    %vm63 = vcmp.ge.s32.totalorder %v61, 0
    %vm64 = vcmp.ge.s32.totalorder %v62, 0
    %vm65 = vcmp.lt.s32.totalorder %v61, 16
    %vm66 = vcmp.lt.s32.totalorder %v62, 16
    %vm67 = vmand %vm63, %vm65
    %vm68 = vmand %vm64, %vm66
    %v69 = vadd.s32 %v43, 4294967295
    %v70 = vadd.s32 %v44, 4294967295
    %vm71 = vcmp.ge.s32.totalorder %v69, 0
    %vm72 = vcmp.ge.s32.totalorder %v70, 0
    %vm73 = vcmp.lt.s32.totalorder %v69, 16
    %vm74 = vcmp.lt.s32.totalorder %v70, 16
    %vm75 = vmand %vm71, %vm73
    %vm76 = vmand %vm72, %vm74
    %v77 = vadd.s32 %v43, 1
    %v78 = vadd.s32 %v44, 1
    %vm79 = vcmp.ge.s32.totalorder %v77, 0
    %vm80 = vcmp.ge.s32.totalorder %v78, 0
    %vm81 = vcmp.lt.s32.totalorder %v77, 16
    %vm82 = vcmp.lt.s32.totalorder %v78, 16
    %vm83 = vmand %vm79, %vm81
    %vm84 = vmand %vm80, %vm82
    %v85 = vadd.s32 %v43, 2
    %v86 = vadd.s32 %v44, 2
    %vm87 = vcmp.ge.s32.totalorder %v85, 0
    %vm88 = vcmp.ge.s32.totalorder %v86, 0
    %vm89 = vcmp.lt.s32.totalorder %v85, 16
    %vm90 = vcmp.lt.s32.totalorder %v86, 16
    %vm91 = vmand %vm87, %vm89
    %vm92 = vmand %vm88, %vm90
    %v93 = vadd.s32 %v43, 3
    %v94 = vadd.s32 %v44, 3
    %vm95 = vcmp.ge.s32.totalorder %v93, 0
    %vm96 = vcmp.ge.s32.totalorder %v94, 0
    %vm97 = vcmp.lt.s32.totalorder %v93, 16
    %vm98 = vcmp.lt.s32.totalorder %v94, 16
    %vm99 = vmand %vm95, %vm97
    %vm100 = vmand %vm96, %vm98
    %v101 = vadd.s32 %v43, 4
    %v102 = vadd.s32 %v44, 4
    %vm103 = vcmp.ge.s32.totalorder %v101, 0
    %vm104 = vcmp.ge.s32.totalorder %v102, 0
    %vm105 = vcmp.lt.s32.totalorder %v101, 16
    %vm106 = vcmp.lt.s32.totalorder %v102, 16
    %vm107 = vmand %vm103, %vm105
    %vm108 = vmand %vm104, %vm106
    %v109 = vld [vmem:[%s0] sm:$0xff]
    %v111 = vcombine.high %v109, %v109
    %112 = vrot.lane.b32.xlu0 %v111, 4
    %v113 = vpop.permute.xlu0 %112
    %115 = vrot.lane.b32.xlu0 %v109, 4
    %v116 = vpop.permute.xlu0 %115
    %vm117 = vcmask 31744
    %v118 = vsel %vm117, %v116, %v113
    %v121 = vsel %vm117, %v113, %v116
    %122 = vrot.lane.b32.xlu0 %v109, 116
    %v123 = vpop.permute.xlu0 %122
    %124 = vrot.lane.b32.xlu0 %v111, 116
    %v125 = vpop.permute.xlu0 %124
    %vm126 = vcmask 949248
    %v127 = vsel %vm126, %v123, %v125
    %v131 = vsel %vm126, %v125, %v123
    %v132 = vsel %vm51, %v121, %v127
    %v133 = vsel %vm52, %v118, %v131
    %v134 = vld [vmem:[%s1] sm:$0xf]
    %135 = vrot.lane.b32.xlu0 %v111, 3
    %v136 = vpop.permute.xlu0 %135
    %138 = vrot.lane.b32.xlu0 %v109, 3
    %v139 = vpop.permute.xlu0 %138
    %vm140 = vcmask 23552
    %v141 = vsel %vm140, %v139, %v136
    %v144 = vsel %vm140, %v136, %v139
    %145 = vrot.lane.b32.xlu0 %v109, 115
    %v146 = vpop.permute.xlu0 %145
    %147 = vrot.lane.b32.xlu0 %v111, 115
    %v148 = vpop.permute.xlu0 %147
    %vm149 = vcmask 941056
    %v150 = vsel %vm149, %v146, %v148
    %v154 = vsel %vm149, %v148, %v146
    %v155 = vsel %vm59, %v144, %v150
    %v156 = vsel %vm60, %v141, %v154
    %s157 = scalar_lea.vmem %s1, 4
    %v158 = vld [vmem:[%s157] sm:$0xf]
    %v160 = vsel %vm117, %v158, 0
    %vm162 = vcmask 1043456
    %v164 = vsel %vm162, %v155, 0
    %v167 = vsel %vm162, %v156, 0
    %169 = vmatprep.subr.mxu0 %v167
    %170 = vmatpush1.msra.mxu0 %v164
    %171 = vmatprep.subr.mxu0 0.0
    %172 = vmatpush1.msra.mxu0 0.0
    %173 = vmatprep.subr.mxu0 0.0
    %174 = vmatpush1.msra.mxu0 0.0
    %175 = vmatprep.subr.mxu0 0.0
    %176 = vmatpush1.msra.mxu0 0.0
    %177 = vmatprep.subr.mxu0 0.0
    %178 = vmatpush1.msra.mxu0 0.0
    %179 = vmatprep.subr.mxu0 0.0
    %180 = vmatpush1.msra.mxu0 0.0
    %181 = vmatprep.subr.mxu0 0.0
    %182 = vmatpush1.msra.mxu0 0.0
    %183 = vmatprep.subr.mxu0 0.0
    %184 = vmatpush1.msra.mxu0 0.0
    %185 = vmatprep.subr.mxu0 0.0
    %186 = vmatpush1.msra.mxu0 0.0
    %187 = vmatprep.subr.mxu0 0.0
    %188 = vmatpush1.msra.mxu0 0.0
    %189 = vmatprep.subr.mxu0 0.0
    %190 = vmatpush1.msra.mxu0 0.0
    %191 = vmatprep.subr.mxu0 0.0
    %192 = vmatpush1.msra.mxu0 0.0
    %193 = vmatprep.subr.mxu0 0.0
    %194 = vmatpush1.msra.mxu0 0.0
    %195 = vmatprep.subr.mxu0 0.0
    %196 = vmatpush1.msra.mxu0 0.0
    %197 = vmatprep.subr.mxu0 0.0
    %198 = vmatpush1.msra.mxu0 0.0
    %199 = vmatprep.subr.mxu0 0.0
    %200 = vmatpush1.msra.mxu0 0.0
    %201 = vmatprep.subr.mxu0 0.0
    %202 = vmatpush1.msra.mxu0 0.0
    %203 = vmatprep.subr.mxu0 0.0
    %204 = vmatpush1.msra.mxu0 0.0
    %205 = vmatprep.subr.mxu0 0.0
    %206 = vmatpush1.msra.mxu0 0.0
    %207 = vmatprep.subr.mxu0 0.0
    %208 = vmatpush1.msra.mxu0 0.0
    %209 = vmatprep.subr.mxu0 0.0
    %210 = vmatpush1.msra.mxu0 0.0
    %211 = vmatprep.subr.mxu0 0.0
    %212 = vmatpush1.msra.mxu0 0.0
    %213 = vmatprep.subr.mxu0 0.0
    %214 = vmatpush1.msra.mxu0 0.0
    %215 = vmatprep.subr.mxu0 0.0
    %216 = vmatpush1.msra.mxu0 0.0
    %217 = vmatprep.subr.mxu0 0.0
    %218 = vmatpush1.msra.mxu0 0.0
    %219 = vmatprep.subr.mxu0 0.0
    %220 = vmatpush1.msra.mxu0 0.0
    %221 = vmatprep.subr.mxu0 0.0
    %222 = vmatpush1.msra.mxu0 0.0
    %223 = vmatprep.subr.mxu0 0.0
    %224 = vmatpush1.msra.mxu0 0.0
    %225 = vmatprep.subr.mxu0 0.0
    %226 = vmatpush1.msra.mxu0 0.0
    %227 = vmatprep.subr.mxu0 0.0
    %228 = vmatpush1.msra.mxu0 0.0
    %229 = vmatprep.subr.mxu0 0.0
    %230 = vmatpush1.msra.mxu0 0.0
    %231 = vmatprep.subr.mxu0 0.0
    %232 = vmatpush1.msra.mxu0 0.0
    %233 = vmatprep.mubr.f32.mxu0 0.0
    %234 = vmatmul.mubr.f32.gmra.mrb[0].mxu0 %v160
    %v235 = vpop.f32.mrb[0].mxu0
    %v236 = vadd.f32 0.0, %v235
    %v237 = vpop.f32.mrb[0].mxu0
    %v238 = vadd.f32 0.0, %v237
    %239 = vdwg.mxu0
    %v241 = vsel %vm117, %v134, 0
    %v244 = vsel %vm162, %v132, 0
    %v247 = vsel %vm162, %v133, 0
    %249 = vmatprep.subr.mxu0 %v247
    %250 = vmatpush1.msra.mxu0 %v244
    %251 = vmatprep.subr.mxu0 0.0
    %252 = vmatpush1.msra.mxu0 0.0
    %253 = vmatprep.subr.mxu0 0.0
    %254 = vmatpush1.msra.mxu0 0.0
    %255 = vmatprep.subr.mxu0 0.0
    %256 = vmatpush1.msra.mxu0 0.0
    %257 = vmatprep.subr.mxu0 0.0
    %258 = vmatpush1.msra.mxu0 0.0
    %259 = vmatprep.subr.mxu0 0.0
    %260 = vmatpush1.msra.mxu0 0.0
    %261 = vmatprep.subr.mxu0 0.0
    %262 = vmatpush1.msra.mxu0 0.0
    %263 = vmatprep.subr.mxu0 0.0
    %264 = vmatpush1.msra.mxu0 0.0
    %265 = vmatprep.subr.mxu0 0.0
    %266 = vmatpush1.msra.mxu0 0.0
    %267 = vmatprep.subr.mxu0 0.0
    %268 = vmatpush1.msra.mxu0 0.0
    %269 = vmatprep.subr.mxu0 0.0
    %270 = vmatpush1.msra.mxu0 0.0
    %271 = vmatprep.subr.mxu0 0.0
    %272 = vmatpush1.msra.mxu0 0.0
    %273 = vmatprep.subr.mxu0 0.0
    %274 = vmatpush1.msra.mxu0 0.0
    %275 = vmatprep.subr.mxu0 0.0
    %276 = vmatpush1.msra.mxu0 0.0
    %277 = vmatprep.subr.mxu0 0.0
    %278 = vmatpush1.msra.mxu0 0.0
    %279 = vmatprep.subr.mxu0 0.0
    %280 = vmatpush1.msra.mxu0 0.0
    %281 = vmatprep.subr.mxu0 0.0
    %282 = vmatpush1.msra.mxu0 0.0
    %283 = vmatprep.subr.mxu0 0.0
    %284 = vmatpush1.msra.mxu0 0.0
    %285 = vmatprep.subr.mxu0 0.0
    %286 = vmatpush1.msra.mxu0 0.0
    %287 = vmatprep.subr.mxu0 0.0
    %288 = vmatpush1.msra.mxu0 0.0
    %289 = vmatprep.subr.mxu0 0.0
    %290 = vmatpush1.msra.mxu0 0.0
    %291 = vmatprep.subr.mxu0 0.0
    %292 = vmatpush1.msra.mxu0 0.0
    %293 = vmatprep.subr.mxu0 0.0
    %294 = vmatpush1.msra.mxu0 0.0
    %295 = vmatprep.subr.mxu0 0.0
    %296 = vmatpush1.msra.mxu0 0.0
    %297 = vmatprep.subr.mxu0 0.0
    %298 = vmatpush1.msra.mxu0 0.0
    %299 = vmatprep.subr.mxu0 0.0
    %300 = vmatpush1.msra.mxu0 0.0
    %301 = vmatprep.subr.mxu0 0.0
    %302 = vmatpush1.msra.mxu0 0.0
    %303 = vmatprep.subr.mxu0 0.0
    %304 = vmatpush1.msra.mxu0 0.0
    %305 = vmatprep.subr.mxu0 0.0
    %306 = vmatpush1.msra.mxu0 0.0
    %307 = vmatprep.subr.mxu0 0.0
    %308 = vmatpush1.msra.mxu0 0.0
    %309 = vmatprep.subr.mxu0 0.0
    %310 = vmatpush1.msra.mxu0 0.0
    %311 = vmatprep.subr.mxu0 0.0
    %312 = vmatpush1.msra.mxu0 0.0
    %313 = vmatprep.mubr.f32.mxu0 0.0
    %314 = vmatmul.mubr.f32.gmra.mrb[0].mxu0 %v241
    %v315 = vpop.f32.mrb[0].mxu0
    %v316 = vadd.f32 %v236, %v315
    %v317 = vpop.f32.mrb[0].mxu0
    %v318 = vadd.f32 %v238, %v317
    %319 = vdwg.mxu0
    %320 = vrot.lane.b32.xlu0 %v111, 2
    %v321 = vpop.permute.xlu0 %320
    %323 = vrot.lane.b32.xlu0 %v109, 2
    %v324 = vpop.permute.xlu0 %323
    %vm325 = vcmask 15360
    %v326 = vsel %vm325, %v324, %v321
    %v329 = vsel %vm325, %v321, %v324
    %330 = vrot.lane.b32.xlu0 %v109, 114
    %v331 = vpop.permute.xlu0 %330
    %332 = vrot.lane.b32.xlu0 %v111, 114
    %v333 = vpop.permute.xlu0 %332
    %vm334 = vcmask 932864
    %v335 = vsel %vm334, %v331, %v333
    %v339 = vsel %vm334, %v333, %v331
    %v340 = vsel %vm67, %v329, %v335
    %v341 = vsel %vm68, %v326, %v339
    %s342 = scalar_lea.vmem %s1, 8
    %v343 = vld [vmem:[%s342] sm:$0xf]
    %v345 = vsel %vm117, %v343, 0
    %v348 = vsel %vm162, %v340, 0
    %v351 = vsel %vm162, %v341, 0
    %353 = vmatprep.subr.mxu0 %v351
    %354 = vmatpush1.msra.mxu0 %v348
    %355 = vmatprep.subr.mxu0 0.0
    %356 = vmatpush1.msra.mxu0 0.0
    %357 = vmatprep.subr.mxu0 0.0
    %358 = vmatpush1.msra.mxu0 0.0
    %359 = vmatprep.subr.mxu0 0.0
    %360 = vmatpush1.msra.mxu0 0.0
    %361 = vmatprep.subr.mxu0 0.0
    %362 = vmatpush1.msra.mxu0 0.0
    %363 = vmatprep.subr.mxu0 0.0
    %364 = vmatpush1.msra.mxu0 0.0
    %365 = vmatprep.subr.mxu0 0.0
    %366 = vmatpush1.msra.mxu0 0.0
    %367 = vmatprep.subr.mxu0 0.0
    %368 = vmatpush1.msra.mxu0 0.0
    %369 = vmatprep.subr.mxu0 0.0
    %370 = vmatpush1.msra.mxu0 0.0
    %371 = vmatprep.subr.mxu0 0.0
    %372 = vmatpush1.msra.mxu0 0.0
    %373 = vmatprep.subr.mxu0 0.0
    %374 = vmatpush1.msra.mxu0 0.0
    %375 = vmatprep.subr.mxu0 0.0
    %376 = vmatpush1.msra.mxu0 0.0
    %377 = vmatprep.subr.mxu0 0.0
    %378 = vmatpush1.msra.mxu0 0.0
    %379 = vmatprep.subr.mxu0 0.0
    %380 = vmatpush1.msra.mxu0 0.0
    %381 = vmatprep.subr.mxu0 0.0
    %382 = vmatpush1.msra.mxu0 0.0
    %383 = vmatprep.subr.mxu0 0.0
    %384 = vmatpush1.msra.mxu0 0.0
    %385 = vmatprep.subr.mxu0 0.0
    %386 = vmatpush1.msra.mxu0 0.0
    %387 = vmatprep.subr.mxu0 0.0
    %388 = vmatpush1.msra.mxu0 0.0
    %389 = vmatprep.subr.mxu0 0.0
    %390 = vmatpush1.msra.mxu0 0.0
    %391 = vmatprep.subr.mxu0 0.0
    %392 = vmatpush1.msra.mxu0 0.0
    %393 = vmatprep.subr.mxu0 0.0
    %394 = vmatpush1.msra.mxu0 0.0
    %395 = vmatprep.subr.mxu0 0.0
    %396 = vmatpush1.msra.mxu0 0.0
    %397 = vmatprep.subr.mxu0 0.0
    %398 = vmatpush1.msra.mxu0 0.0
    %399 = vmatprep.subr.mxu0 0.0
    %400 = vmatpush1.msra.mxu0 0.0
    %401 = vmatprep.subr.mxu0 0.0
    %402 = vmatpush1.msra.mxu0 0.0
    %403 = vmatprep.subr.mxu0 0.0
    %404 = vmatpush1.msra.mxu0 0.0
    %405 = vmatprep.subr.mxu0 0.0
    %406 = vmatpush1.msra.mxu0 0.0
    %407 = vmatprep.subr.mxu0 0.0
    %408 = vmatpush1.msra.mxu0 0.0
    %409 = vmatprep.subr.mxu0 0.0
    %410 = vmatpush1.msra.mxu0 0.0
    %411 = vmatprep.subr.mxu0 0.0
    %412 = vmatpush1.msra.mxu0 0.0
    %413 = vmatprep.subr.mxu0 0.0
    %414 = vmatpush1.msra.mxu0 0.0
    %415 = vmatprep.subr.mxu0 0.0
    %416 = vmatpush1.msra.mxu0 0.0
    %417 = vmatprep.mubr.f32.mxu0 0.0
    %418 = vmatmul.mubr.f32.gmra.mrb[0].mxu0 %v345
    %v419 = vpop.f32.mrb[0].mxu0
    %v420 = vadd.f32 0.0, %v419
    %v421 = vpop.f32.mrb[0].mxu0
    %v422 = vadd.f32 0.0, %v421
    %423 = vdwg.mxu0
    %v424 = vadd.f32 %v316, %v420
    %v425 = vadd.f32 %v318, %v422
    %426 = vrot.lane.b32.xlu0 %v111, 1
    %v427 = vpop.permute.xlu0 %426
    %429 = vrot.lane.b32.xlu0 %v109, 1
    %v430 = vpop.permute.xlu0 %429
    %vm431 = vcmask 7168
    %v432 = vsel %vm431, %v430, %v427
    %v435 = vsel %vm431, %v427, %v430
    %436 = vrot.lane.b32.xlu0 %v109, 113
    %v437 = vpop.permute.xlu0 %436
    %438 = vrot.lane.b32.xlu0 %v111, 113
    %v439 = vpop.permute.xlu0 %438
    %vm440 = vcmask 924672
    %v441 = vsel %vm440, %v437, %v439
    %v445 = vsel %vm440, %v439, %v437
    %v446 = vsel %vm75, %v435, %v441
    %v447 = vsel %vm76, %v432, %v445
    %s448 = scalar_lea.vmem %s1, 12
    %v449 = vld [vmem:[%s448] sm:$0xf]
    %v451 = vsel %vm117, %v449, 0
    %v454 = vsel %vm162, %v446, 0
    %v457 = vsel %vm162, %v447, 0
    %459 = vmatprep.subr.mxu0 %v457
    %460 = vmatpush1.msra.mxu0 %v454
    %461 = vmatprep.subr.mxu0 0.0
    %462 = vmatpush1.msra.mxu0 0.0
    %463 = vmatprep.subr.mxu0 0.0
    %464 = vmatpush1.msra.mxu0 0.0
    %465 = vmatprep.subr.mxu0 0.0
    %466 = vmatpush1.msra.mxu0 0.0
    %467 = vmatprep.subr.mxu0 0.0
    %468 = vmatpush1.msra.mxu0 0.0
    %469 = vmatprep.subr.mxu0 0.0
    %470 = vmatpush1.msra.mxu0 0.0
    %471 = vmatprep.subr.mxu0 0.0
    %472 = vmatpush1.msra.mxu0 0.0
    %473 = vmatprep.subr.mxu0 0.0
    %474 = vmatpush1.msra.mxu0 0.0
    %475 = vmatprep.subr.mxu0 0.0
    %476 = vmatpush1.msra.mxu0 0.0
    %477 = vmatprep.subr.mxu0 0.0
    %478 = vmatpush1.msra.mxu0 0.0
    %479 = vmatprep.subr.mxu0 0.0
    %480 = vmatpush1.msra.mxu0 0.0
    %481 = vmatprep.subr.mxu0 0.0
    %482 = vmatpush1.msra.mxu0 0.0
    %483 = vmatprep.subr.mxu0 0.0
    %484 = vmatpush1.msra.mxu0 0.0
    %485 = vmatprep.subr.mxu0 0.0
    %486 = vmatpush1.msra.mxu0 0.0
    %487 = vmatprep.subr.mxu0 0.0
    %488 = vmatpush1.msra.mxu0 0.0
    %489 = vmatprep.subr.mxu0 0.0
    %490 = vmatpush1.msra.mxu0 0.0
    %491 = vmatprep.subr.mxu0 0.0
    %492 = vmatpush1.msra.mxu0 0.0
    %493 = vmatprep.subr.mxu0 0.0
    %494 = vmatpush1.msra.mxu0 0.0
    %495 = vmatprep.subr.mxu0 0.0
    %496 = vmatpush1.msra.mxu0 0.0
    %497 = vmatprep.subr.mxu0 0.0
    %498 = vmatpush1.msra.mxu0 0.0
    %499 = vmatprep.subr.mxu0 0.0
    %500 = vmatpush1.msra.mxu0 0.0
    %501 = vmatprep.subr.mxu0 0.0
    %502 = vmatpush1.msra.mxu0 0.0
    %503 = vmatprep.subr.mxu0 0.0
    %504 = vmatpush1.msra.mxu0 0.0
    %505 = vmatprep.subr.mxu0 0.0
    %506 = vmatpush1.msra.mxu0 0.0
    %507 = vmatprep.subr.mxu0 0.0
    %508 = vmatpush1.msra.mxu0 0.0
    %509 = vmatprep.subr.mxu0 0.0
    %510 = vmatpush1.msra.mxu0 0.0
    %511 = vmatprep.subr.mxu0 0.0
    %512 = vmatpush1.msra.mxu0 0.0
    %513 = vmatprep.subr.mxu0 0.0
    %514 = vmatpush1.msra.mxu0 0.0
    %515 = vmatprep.subr.mxu0 0.0
    %516 = vmatpush1.msra.mxu0 0.0
    %517 = vmatprep.subr.mxu0 0.0
    %518 = vmatpush1.msra.mxu0 0.0
    %519 = vmatprep.subr.mxu0 0.0
    %520 = vmatpush1.msra.mxu0 0.0
    %521 = vmatprep.subr.mxu0 0.0
    %522 = vmatpush1.msra.mxu0 0.0
    %523 = vmatprep.mubr.f32.mxu0 0.0
    %524 = vmatmul.mubr.f32.gmra.mrb[0].mxu0 %v451
    %v525 = vpop.f32.mrb[0].mxu0
    %v526 = vadd.f32 0.0, %v525
    %v527 = vpop.f32.mrb[0].mxu0
    %v528 = vadd.f32 0.0, %v527
    %529 = vdwg.mxu0
    %v530 = vadd.f32 %v424, %v526
    %v531 = vadd.f32 %v425, %v528
    %s532 = scalar_lea.vmem %s1, 16
    %v533 = vld [vmem:[%s532] sm:$0xf]
    %v535 = vsel %vm117, %v533, 0
    %v537 = vsel %vm162, %v109, 0
    %v539 = vsel %vm162, %v111, 0
    %541 = vmatprep.subr.mxu0 %v539
    %542 = vmatpush1.msra.mxu0 %v537
    %543 = vmatprep.subr.mxu0 0.0
    %544 = vmatpush1.msra.mxu0 0.0
    %545 = vmatprep.subr.mxu0 0.0
    %546 = vmatpush1.msra.mxu0 0.0
    %547 = vmatprep.subr.mxu0 0.0
    %548 = vmatpush1.msra.mxu0 0.0
    %549 = vmatprep.subr.mxu0 0.0
    %550 = vmatpush1.msra.mxu0 0.0
    %551 = vmatprep.subr.mxu0 0.0
    %552 = vmatpush1.msra.mxu0 0.0
    %553 = vmatprep.subr.mxu0 0.0
    %554 = vmatpush1.msra.mxu0 0.0
    %555 = vmatprep.subr.mxu0 0.0
    %556 = vmatpush1.msra.mxu0 0.0
    %557 = vmatprep.subr.mxu0 0.0
    %558 = vmatpush1.msra.mxu0 0.0
    %559 = vmatprep.subr.mxu0 0.0
    %560 = vmatpush1.msra.mxu0 0.0
    %561 = vmatprep.subr.mxu0 0.0
    %562 = vmatpush1.msra.mxu0 0.0
    %563 = vmatprep.subr.mxu0 0.0
    %564 = vmatpush1.msra.mxu0 0.0
    %565 = vmatprep.subr.mxu0 0.0
    %566 = vmatpush1.msra.mxu0 0.0
    %567 = vmatprep.subr.mxu0 0.0
    %568 = vmatpush1.msra.mxu0 0.0
    %569 = vmatprep.subr.mxu0 0.0
    %570 = vmatpush1.msra.mxu0 0.0
    %571 = vmatprep.subr.mxu0 0.0
    %572 = vmatpush1.msra.mxu0 0.0
    %573 = vmatprep.subr.mxu0 0.0
    %574 = vmatpush1.msra.mxu0 0.0
    %575 = vmatprep.subr.mxu0 0.0
    %576 = vmatpush1.msra.mxu0 0.0
    %577 = vmatprep.subr.mxu0 0.0
    %578 = vmatpush1.msra.mxu0 0.0
    %579 = vmatprep.subr.mxu0 0.0
    %580 = vmatpush1.msra.mxu0 0.0
    %581 = vmatprep.subr.mxu0 0.0
    %582 = vmatpush1.msra.mxu0 0.0
    %583 = vmatprep.subr.mxu0 0.0
    %584 = vmatpush1.msra.mxu0 0.0
    %585 = vmatprep.subr.mxu0 0.0
    %586 = vmatpush1.msra.mxu0 0.0
    %587 = vmatprep.subr.mxu0 0.0
    %588 = vmatpush1.msra.mxu0 0.0
    %589 = vmatprep.subr.mxu0 0.0
    %590 = vmatpush1.msra.mxu0 0.0
    %591 = vmatprep.subr.mxu0 0.0
    %592 = vmatpush1.msra.mxu0 0.0
    %593 = vmatprep.subr.mxu0 0.0
    %594 = vmatpush1.msra.mxu0 0.0
    %595 = vmatprep.subr.mxu0 0.0
    %596 = vmatpush1.msra.mxu0 0.0
    %597 = vmatprep.subr.mxu0 0.0
    %598 = vmatpush1.msra.mxu0 0.0
    %599 = vmatprep.subr.mxu0 0.0
    %600 = vmatpush1.msra.mxu0 0.0
    %601 = vmatprep.subr.mxu0 0.0
    %602 = vmatpush1.msra.mxu0 0.0
    %603 = vmatprep.subr.mxu0 0.0
    %604 = vmatpush1.msra.mxu0 0.0
    %605 = vmatprep.mubr.f32.mxu0 0.0
    %606 = vmatmul.mubr.f32.gmra.mrb[0].mxu0 %v535
    %v607 = vpop.f32.mrb[0].mxu0
    %v608 = vadd.f32 0.0, %v607
    %v609 = vpop.f32.mrb[0].mxu0
    %v610 = vadd.f32 0.0, %v609
    %611 = vdwg.mxu0
    %v612 = vadd.f32 %v530, %v608
    %v613 = vadd.f32 %v531, %v610
    %614 = vrot.lane.b32.xlu0 %v109, 127
    %v615 = vpop.permute.xlu0 %614
    %616 = vrot.lane.b32.xlu0 %v111, 127
    %v617 = vpop.permute.xlu0 %616
    %vm618 = vcmask 1039360
    %v619 = vsel %vm618, %v615, %v617
    %v623 = vsel %vm618, %v617, %v615
    %624 = vrot.lane.b32.xlu0 %v111, 15
    %v625 = vpop.permute.xlu0 %624
    %627 = vrot.lane.b32.xlu0 %v109, 15
    %v628 = vpop.permute.xlu0 %627
    %vm629 = vcmask 121856
    %v630 = vsel %vm629, %v628, %v625
    %v633 = vsel %vm629, %v625, %v628
    %v634 = vsel %vm83, %v619, %v633
    %v635 = vsel %vm84, %v623, %v630
    %s636 = scalar_lea.vmem %s1, 20
    %v637 = vld [vmem:[%s636] sm:$0xf]
    %v639 = vsel %vm117, %v637, 0
    %v642 = vsel %vm162, %v634, 0
    %v645 = vsel %vm162, %v635, 0
    %647 = vmatprep.subr.mxu0 %v645
    %648 = vmatpush1.msra.mxu0 %v642
    %649 = vmatprep.subr.mxu0 0.0
    %650 = vmatpush1.msra.mxu0 0.0
    %651 = vmatprep.subr.mxu0 0.0
    %652 = vmatpush1.msra.mxu0 0.0
    %653 = vmatprep.subr.mxu0 0.0
    %654 = vmatpush1.msra.mxu0 0.0
    %655 = vmatprep.subr.mxu0 0.0
    %656 = vmatpush1.msra.mxu0 0.0
    %657 = vmatprep.subr.mxu0 0.0
    %658 = vmatpush1.msra.mxu0 0.0
    %659 = vmatprep.subr.mxu0 0.0
    %660 = vmatpush1.msra.mxu0 0.0
    %661 = vmatprep.subr.mxu0 0.0
    %662 = vmatpush1.msra.mxu0 0.0
    %663 = vmatprep.subr.mxu0 0.0
    %664 = vmatpush1.msra.mxu0 0.0
    %665 = vmatprep.subr.mxu0 0.0
    %666 = vmatpush1.msra.mxu0 0.0
    %667 = vmatprep.subr.mxu0 0.0
    %668 = vmatpush1.msra.mxu0 0.0
    %669 = vmatprep.subr.mxu0 0.0
    %670 = vmatpush1.msra.mxu0 0.0
    %671 = vmatprep.subr.mxu0 0.0
    %672 = vmatpush1.msra.mxu0 0.0
    %673 = vmatprep.subr.mxu0 0.0
    %674 = vmatpush1.msra.mxu0 0.0
    %675 = vmatprep.subr.mxu0 0.0
    %676 = vmatpush1.msra.mxu0 0.0
    %677 = vmatprep.subr.mxu0 0.0
    %678 = vmatpush1.msra.mxu0 0.0
    %679 = vmatprep.subr.mxu0 0.0
    %680 = vmatpush1.msra.mxu0 0.0
    %681 = vmatprep.subr.mxu0 0.0
    %682 = vmatpush1.msra.mxu0 0.0
    %683 = vmatprep.subr.mxu0 0.0
    %684 = vmatpush1.msra.mxu0 0.0
    %685 = vmatprep.subr.mxu0 0.0
    %686 = vmatpush1.msra.mxu0 0.0
    %687 = vmatprep.subr.mxu0 0.0
    %688 = vmatpush1.msra.mxu0 0.0
    %689 = vmatprep.subr.mxu0 0.0
    %690 = vmatpush1.msra.mxu0 0.0
    %691 = vmatprep.subr.mxu0 0.0
    %692 = vmatpush1.msra.mxu0 0.0
    %693 = vmatprep.subr.mxu0 0.0
    %694 = vmatpush1.msra.mxu0 0.0
    %695 = vmatprep.subr.mxu0 0.0
    %696 = vmatpush1.msra.mxu0 0.0
    %697 = vmatprep.subr.mxu0 0.0
    %698 = vmatpush1.msra.mxu0 0.0
    %699 = vmatprep.subr.mxu0 0.0
    %700 = vmatpush1.msra.mxu0 0.0
    %701 = vmatprep.subr.mxu0 0.0
    %702 = vmatpush1.msra.mxu0 0.0
    %703 = vmatprep.subr.mxu0 0.0
    %704 = vmatpush1.msra.mxu0 0.0
    %705 = vmatprep.subr.mxu0 0.0
    %706 = vmatpush1.msra.mxu0 0.0
    %707 = vmatprep.subr.mxu0 0.0
    %708 = vmatpush1.msra.mxu0 0.0
    %709 = vmatprep.subr.mxu0 0.0
    %710 = vmatpush1.msra.mxu0 0.0
    %711 = vmatprep.mubr.f32.mxu0 0.0
    %712 = vmatmul.mubr.f32.gmra.mrb[0].mxu0 %v639
    %v713 = vpop.f32.mrb[0].mxu0
    %v714 = vadd.f32 0.0, %v713
    %v715 = vpop.f32.mrb[0].mxu0
    %v716 = vadd.f32 0.0, %v715
    %717 = vdwg.mxu0
    %v718 = vadd.f32 %v612, %v714
    %v719 = vadd.f32 %v613, %v716
    %720 = vrot.lane.b32.xlu0 %v109, 126
    %v721 = vpop.permute.xlu0 %720
    %722 = vrot.lane.b32.xlu0 %v111, 126
    %v723 = vpop.permute.xlu0 %722
    %vm724 = vcmask 1031168
    %v725 = vsel %vm724, %v721, %v723
    %v729 = vsel %vm724, %v723, %v721
    %730 = vrot.lane.b32.xlu0 %v111, 14
    %v731 = vpop.permute.xlu0 %730
    %733 = vrot.lane.b32.xlu0 %v109, 14
    %v734 = vpop.permute.xlu0 %733
    %vm735 = vcmask 113664
    %v736 = vsel %vm735, %v734, %v731
    %v739 = vsel %vm735, %v731, %v734
    %v740 = vsel %vm91, %v725, %v739
    %v741 = vsel %vm92, %v729, %v736
    %s742 = scalar_lea.vmem %s1, 24
    %v743 = vld [vmem:[%s742] sm:$0xf]
    %v745 = vsel %vm117, %v743, 0
    %v748 = vsel %vm162, %v740, 0
    %v751 = vsel %vm162, %v741, 0
    %753 = vmatprep.subr.mxu0 %v751
    %754 = vmatpush1.msra.mxu0 %v748
    %755 = vmatprep.subr.mxu0 0.0
    %756 = vmatpush1.msra.mxu0 0.0
    %757 = vmatprep.subr.mxu0 0.0
    %758 = vmatpush1.msra.mxu0 0.0
    %759 = vmatprep.subr.mxu0 0.0
    %760 = vmatpush1.msra.mxu0 0.0
    %761 = vmatprep.subr.mxu0 0.0
    %762 = vmatpush1.msra.mxu0 0.0
    %763 = vmatprep.subr.mxu0 0.0
    %764 = vmatpush1.msra.mxu0 0.0
    %765 = vmatprep.subr.mxu0 0.0
    %766 = vmatpush1.msra.mxu0 0.0
    %767 = vmatprep.subr.mxu0 0.0
    %768 = vmatpush1.msra.mxu0 0.0
    %769 = vmatprep.subr.mxu0 0.0
    %770 = vmatpush1.msra.mxu0 0.0
    %771 = vmatprep.subr.mxu0 0.0
    %772 = vmatpush1.msra.mxu0 0.0
    %773 = vmatprep.subr.mxu0 0.0
    %774 = vmatpush1.msra.mxu0 0.0
    %775 = vmatprep.subr.mxu0 0.0
    %776 = vmatpush1.msra.mxu0 0.0
    %777 = vmatprep.subr.mxu0 0.0
    %778 = vmatpush1.msra.mxu0 0.0
    %779 = vmatprep.subr.mxu0 0.0
    %780 = vmatpush1.msra.mxu0 0.0
    %781 = vmatprep.subr.mxu0 0.0
    %782 = vmatpush1.msra.mxu0 0.0
    %783 = vmatprep.subr.mxu0 0.0
    %784 = vmatpush1.msra.mxu0 0.0
    %785 = vmatprep.subr.mxu0 0.0
    %786 = vmatpush1.msra.mxu0 0.0
    %787 = vmatprep.subr.mxu0 0.0
    %788 = vmatpush1.msra.mxu0 0.0
    %789 = vmatprep.subr.mxu0 0.0
    %790 = vmatpush1.msra.mxu0 0.0
    %791 = vmatprep.subr.mxu0 0.0
    %792 = vmatpush1.msra.mxu0 0.0
    %793 = vmatprep.subr.mxu0 0.0
    %794 = vmatpush1.msra.mxu0 0.0
    %795 = vmatprep.subr.mxu0 0.0
    %796 = vmatpush1.msra.mxu0 0.0
    %797 = vmatprep.subr.mxu0 0.0
    %798 = vmatpush1.msra.mxu0 0.0
    %799 = vmatprep.subr.mxu0 0.0
    %800 = vmatpush1.msra.mxu0 0.0
    %801 = vmatprep.subr.mxu0 0.0
    %802 = vmatpush1.msra.mxu0 0.0
    %803 = vmatprep.subr.mxu0 0.0
    %804 = vmatpush1.msra.mxu0 0.0
    %805 = vmatprep.subr.mxu0 0.0
    %806 = vmatpush1.msra.mxu0 0.0
    %807 = vmatprep.subr.mxu0 0.0
    %808 = vmatpush1.msra.mxu0 0.0
    %809 = vmatprep.subr.mxu0 0.0
    %810 = vmatpush1.msra.mxu0 0.0
    %811 = vmatprep.subr.mxu0 0.0
    %812 = vmatpush1.msra.mxu0 0.0
    %813 = vmatprep.subr.mxu0 0.0
    %814 = vmatpush1.msra.mxu0 0.0
    %815 = vmatprep.subr.mxu0 0.0
    %816 = vmatpush1.msra.mxu0 0.0
    %817 = vmatprep.mubr.f32.mxu0 0.0
    %818 = vmatmul.mubr.f32.gmra.mrb[0].mxu0 %v745
    %v819 = vpop.f32.mrb[0].mxu0
    %v820 = vadd.f32 0.0, %v819
    %v821 = vpop.f32.mrb[0].mxu0
    %v822 = vadd.f32 0.0, %v821
    %823 = vdwg.mxu0
    %v824 = vadd.f32 %v718, %v820
    %v825 = vadd.f32 %v719, %v822
    %826 = vrot.lane.b32.xlu0 %v109, 125
    %v827 = vpop.permute.xlu0 %826
    %828 = vrot.lane.b32.xlu0 %v111, 125
    %v829 = vpop.permute.xlu0 %828
    %vm830 = vcmask 1022976
    %v831 = vsel %vm830, %v827, %v829
    %v835 = vsel %vm830, %v829, %v827
    %836 = vrot.lane.b32.xlu0 %v111, 13
    %v837 = vpop.permute.xlu0 %836
    %839 = vrot.lane.b32.xlu0 %v109, 13
    %v840 = vpop.permute.xlu0 %839
    %vm841 = vcmask 105472
    %v842 = vsel %vm841, %v840, %v837
    %v845 = vsel %vm841, %v837, %v840
    %v846 = vsel %vm99, %v831, %v845
    %v847 = vsel %vm100, %v835, %v842
    %s848 = scalar_lea.vmem %s1, 28
    %v849 = vld [vmem:[%s848] sm:$0xf]
    %v851 = vsel %vm117, %v849, 0
    %v854 = vsel %vm162, %v846, 0
    %v857 = vsel %vm162, %v847, 0
    %859 = vmatprep.subr.mxu0 %v857
    %860 = vmatpush1.msra.mxu0 %v854
    %861 = vmatprep.subr.mxu0 0.0
    %862 = vmatpush1.msra.mxu0 0.0
    %863 = vmatprep.subr.mxu0 0.0
    %864 = vmatpush1.msra.mxu0 0.0
    %865 = vmatprep.subr.mxu0 0.0
    %866 = vmatpush1.msra.mxu0 0.0
    %867 = vmatprep.subr.mxu0 0.0
    %868 = vmatpush1.msra.mxu0 0.0
    %869 = vmatprep.subr.mxu0 0.0
    %870 = vmatpush1.msra.mxu0 0.0
    %871 = vmatprep.subr.mxu0 0.0
    %872 = vmatpush1.msra.mxu0 0.0
    %873 = vmatprep.subr.mxu0 0.0
    %874 = vmatpush1.msra.mxu0 0.0
    %875 = vmatprep.subr.mxu0 0.0
    %876 = vmatpush1.msra.mxu0 0.0
    %877 = vmatprep.subr.mxu0 0.0
    %878 = vmatpush1.msra.mxu0 0.0
    %879 = vmatprep.subr.mxu0 0.0
    %880 = vmatpush1.msra.mxu0 0.0
    %881 = vmatprep.subr.mxu0 0.0
    %882 = vmatpush1.msra.mxu0 0.0
    %883 = vmatprep.subr.mxu0 0.0
    %884 = vmatpush1.msra.mxu0 0.0
    %885 = vmatprep.subr.mxu0 0.0
    %886 = vmatpush1.msra.mxu0 0.0
    %887 = vmatprep.subr.mxu0 0.0
    %888 = vmatpush1.msra.mxu0 0.0
    %889 = vmatprep.subr.mxu0 0.0
    %890 = vmatpush1.msra.mxu0 0.0
    %891 = vmatprep.subr.mxu0 0.0
    %892 = vmatpush1.msra.mxu0 0.0
    %893 = vmatprep.subr.mxu0 0.0
    %894 = vmatpush1.msra.mxu0 0.0
    %895 = vmatprep.subr.mxu0 0.0
    %896 = vmatpush1.msra.mxu0 0.0
    %897 = vmatprep.subr.mxu0 0.0
    %898 = vmatpush1.msra.mxu0 0.0
    %899 = vmatprep.subr.mxu0 0.0
    %900 = vmatpush1.msra.mxu0 0.0
    %901 = vmatprep.subr.mxu0 0.0
    %902 = vmatpush1.msra.mxu0 0.0
    %903 = vmatprep.subr.mxu0 0.0
    %904 = vmatpush1.msra.mxu0 0.0
    %905 = vmatprep.subr.mxu0 0.0
    %906 = vmatpush1.msra.mxu0 0.0
    %907 = vmatprep.subr.mxu0 0.0
    %908 = vmatpush1.msra.mxu0 0.0
    %909 = vmatprep.subr.mxu0 0.0
    %910 = vmatpush1.msra.mxu0 0.0
    %911 = vmatprep.subr.mxu0 0.0
    %912 = vmatpush1.msra.mxu0 0.0
    %913 = vmatprep.subr.mxu0 0.0
    %914 = vmatpush1.msra.mxu0 0.0
    %915 = vmatprep.subr.mxu0 0.0
    %916 = vmatpush1.msra.mxu0 0.0
    %917 = vmatprep.subr.mxu0 0.0
    %918 = vmatpush1.msra.mxu0 0.0
    %919 = vmatprep.subr.mxu0 0.0
    %920 = vmatpush1.msra.mxu0 0.0
    %921 = vmatprep.subr.mxu0 0.0
    %922 = vmatpush1.msra.mxu0 0.0
    %923 = vmatprep.mubr.f32.mxu0 0.0
    %924 = vmatmul.mubr.f32.gmra.mrb[0].mxu0 %v851
    %v925 = vpop.f32.mrb[0].mxu0
    %v926 = vadd.f32 0.0, %v925
    %v927 = vpop.f32.mrb[0].mxu0
    %v928 = vadd.f32 0.0, %v927
    %929 = vdwg.mxu0
    %v930 = vadd.f32 %v824, %v926
    %v931 = vadd.f32 %v825, %v928
    %932 = vrot.lane.b32.xlu0 %v109, 124
    %v933 = vpop.permute.xlu0 %932
    %934 = vrot.lane.b32.xlu0 %v111, 124
    %v935 = vpop.permute.xlu0 %934
    %vm936 = vcmask 1014784
    %v937 = vsel %vm936, %v933, %v935
    %v941 = vsel %vm936, %v935, %v933
    %942 = vrot.lane.b32.xlu0 %v111, 12
    %v943 = vpop.permute.xlu0 %942
    %945 = vrot.lane.b32.xlu0 %v109, 12
    %v946 = vpop.permute.xlu0 %945
    %vm947 = vcmask 97280
    %v948 = vsel %vm947, %v946, %v943
    %v951 = vsel %vm947, %v943, %v946
    %v952 = vsel %vm107, %v937, %v951
    %v953 = vsel %vm108, %v941, %v948
    %s954 = scalar_lea.vmem %s1, 32
    %v955 = vld [vmem:[%s954] sm:$0xf]
    %v957 = vsel %vm117, %v955, 0
    %v960 = vsel %vm162, %v952, 0
    %v963 = vsel %vm162, %v953, 0
    %965 = vmatprep.subr.mxu0 %v963
    %966 = vmatpush1.msra.mxu0 %v960
    %967 = vmatprep.subr.mxu0 0.0
    %968 = vmatpush1.msra.mxu0 0.0
    %969 = vmatprep.subr.mxu0 0.0
    %970 = vmatpush1.msra.mxu0 0.0
    %971 = vmatprep.subr.mxu0 0.0
    %972 = vmatpush1.msra.mxu0 0.0
    %973 = vmatprep.subr.mxu0 0.0
    %974 = vmatpush1.msra.mxu0 0.0
    %975 = vmatprep.subr.mxu0 0.0
    %976 = vmatpush1.msra.mxu0 0.0
    %977 = vmatprep.subr.mxu0 0.0
    %978 = vmatpush1.msra.mxu0 0.0
    %979 = vmatprep.subr.mxu0 0.0
    %980 = vmatpush1.msra.mxu0 0.0
    %981 = vmatprep.subr.mxu0 0.0
    %982 = vmatpush1.msra.mxu0 0.0
    %983 = vmatprep.subr.mxu0 0.0
    %984 = vmatpush1.msra.mxu0 0.0
    %985 = vmatprep.subr.mxu0 0.0
    %986 = vmatpush1.msra.mxu0 0.0
    %987 = vmatprep.subr.mxu0 0.0
    %988 = vmatpush1.msra.mxu0 0.0
    %989 = vmatprep.subr.mxu0 0.0
    %990 = vmatpush1.msra.mxu0 0.0
    %991 = vmatprep.subr.mxu0 0.0
    %992 = vmatpush1.msra.mxu0 0.0
    %993 = vmatprep.subr.mxu0 0.0
    %994 = vmatpush1.msra.mxu0 0.0
    %995 = vmatprep.subr.mxu0 0.0
    %996 = vmatpush1.msra.mxu0 0.0
    %997 = vmatprep.subr.mxu0 0.0
    %998 = vmatpush1.msra.mxu0 0.0
    %999 = vmatprep.subr.mxu0 0.0
    %1000 = vmatpush1.msra.mxu0 0.0
    %1001 = vmatprep.subr.mxu0 0.0
    %1002 = vmatpush1.msra.mxu0 0.0
    %1003 = vmatprep.subr.mxu0 0.0
    %1004 = vmatpush1.msra.mxu0 0.0
    %1005 = vmatprep.subr.mxu0 0.0
    %1006 = vmatpush1.msra.mxu0 0.0
    %1007 = vmatprep.subr.mxu0 0.0
    %1008 = vmatpush1.msra.mxu0 0.0
    %1009 = vmatprep.subr.mxu0 0.0
    %1010 = vmatpush1.msra.mxu0 0.0
    %1011 = vmatprep.subr.mxu0 0.0
    %1012 = vmatpush1.msra.mxu0 0.0
    %1013 = vmatprep.subr.mxu0 0.0
    %1014 = vmatpush1.msra.mxu0 0.0
    %1015 = vmatprep.subr.mxu0 0.0
    %1016 = vmatpush1.msra.mxu0 0.0
    %1017 = vmatprep.subr.mxu0 0.0
    %1018 = vmatpush1.msra.mxu0 0.0
    %1019 = vmatprep.subr.mxu0 0.0
    %1020 = vmatpush1.msra.mxu0 0.0
    %1021 = vmatprep.subr.mxu0 0.0
    %1022 = vmatpush1.msra.mxu0 0.0
    %1023 = vmatprep.subr.mxu0 0.0
    %1024 = vmatpush1.msra.mxu0 0.0
    %1025 = vmatprep.subr.mxu0 0.0
    %1026 = vmatpush1.msra.mxu0 0.0
    %1027 = vmatprep.subr.mxu0 0.0
    %1028 = vmatpush1.msra.mxu0 0.0
    %1029 = vmatprep.mubr.f32.mxu0 0.0
    %1030 = vmatmul.mubr.f32.gmra.mrb[0].mxu0 %v957
    %v1031 = vpop.f32.mrb[0].mxu0
    %v1032 = vadd.f32 0.0, %v1031
    %v1033 = vpop.f32.mrb[0].mxu0
    %v1034 = vadd.f32 0.0, %v1033
    %1035 = vdwg.mxu0
    %v1036 = vadd.f32 %v930, %v1032
    %v1037 = vadd.f32 %v931, %v1034
    %v1040 = vcombine.low %v1036, %v1037
    %1042 = vst [vmem:[#allocation2] sm:$0xff] %v1040
    %v1043 = vsel %vm162, %v1036, 0.0
    %v1044 = vsel %vm162, %v1037, 0.0
    %v1045 = vadd.f32 %v1043, %v1044
    %1046 = vadd.xlane.f32.xlu0 %v1045
    %v1047 = vpop.xlane.xlu0 %1046
    %v1048 = vadd.f32 %v1047, 0.0
    %v1049 = vmul.f32 %v1036, %v1036
    %v1050 = vmul.f32 %v1037, %v1037
    %v1051 = vsel %vm162, %v1049, 0.0
    %v1052 = vsel %vm162, %v1050, 0.0
    %v1053 = vadd.f32 %v1051, %v1052
    %1054 = vadd.xlane.f32.xlu0 %v1053
    %v1055 = vpop.xlane.xlu0 %1054
    %v1056 = vadd.f32 %v1055, 0.0
    %s1057 = scalar_lea.vmem %s0, 8
    %v1058 = vld [vmem:[%s1057] sm:$0xff]
    %v1060 = vcombine.high %v1058, %v1058
    %1061 = vrot.lane.b32.xlu0 %v1060, 4
    %v1062 = vpop.permute.xlu0 %1061
    %1064 = vrot.lane.b32.xlu0 %v1058, 4
    %v1065 = vpop.permute.xlu0 %1064
    %v1066 = vsel %vm117, %v1065, %v1062
    %v1069 = vsel %vm117, %v1062, %v1065
    %1070 = vrot.lane.b32.xlu0 %v1058, 116
    %v1071 = vpop.permute.xlu0 %1070
    %1072 = vrot.lane.b32.xlu0 %v1060, 116
    %v1073 = vpop.permute.xlu0 %1072
    %v1074 = vsel %vm126, %v1071, %v1073
    %v1078 = vsel %vm126, %v1073, %v1071
    %v1079 = vsel %vm51, %v1069, %v1074
    %v1080 = vsel %vm52, %v1066, %v1078
    %v1081 = vld [vmem:[%s1] sm:$0xf]
    %1082 = vrot.lane.b32.xlu0 %v1060, 3
    %v1083 = vpop.permute.xlu0 %1082
    %1085 = vrot.lane.b32.xlu0 %v1058, 3
    %v1086 = vpop.permute.xlu0 %1085
    %v1087 = vsel %vm140, %v1086, %v1083
    %v1090 = vsel %vm140, %v1083, %v1086
    %1091 = vrot.lane.b32.xlu0 %v1058, 115
    %v1092 = vpop.permute.xlu0 %1091
    %1093 = vrot.lane.b32.xlu0 %v1060, 115
    %v1094 = vpop.permute.xlu0 %1093
    %v1095 = vsel %vm149, %v1092, %v1094
    %v1099 = vsel %vm149, %v1094, %v1092
    %v1100 = vsel %vm59, %v1090, %v1095
    %v1101 = vsel %vm60, %v1087, %v1099
    %v1102 = vld [vmem:[%s157] sm:$0xf]
    %v1104 = vsel %vm117, %v1102, 0
    %v1107 = vsel %vm162, %v1100, 0
    %v1110 = vsel %vm162, %v1101, 0
    %1112 = vmatprep.subr.mxu0 %v1110
    %1113 = vmatpush1.msra.mxu0 %v1107
    %1114 = vmatprep.subr.mxu0 0.0
    %1115 = vmatpush1.msra.mxu0 0.0
    %1116 = vmatprep.subr.mxu0 0.0
    %1117 = vmatpush1.msra.mxu0 0.0
    %1118 = vmatprep.subr.mxu0 0.0
    %1119 = vmatpush1.msra.mxu0 0.0
    %1120 = vmatprep.subr.mxu0 0.0
    %1121 = vmatpush1.msra.mxu0 0.0
    %1122 = vmatprep.subr.mxu0 0.0
    %1123 = vmatpush1.msra.mxu0 0.0
    %1124 = vmatprep.subr.mxu0 0.0
    %1125 = vmatpush1.msra.mxu0 0.0
    %1126 = vmatprep.subr.mxu0 0.0
    %1127 = vmatpush1.msra.mxu0 0.0
    %1128 = vmatprep.subr.mxu0 0.0
    %1129 = vmatpush1.msra.mxu0 0.0
    %1130 = vmatprep.subr.mxu0 0.0
    %1131 = vmatpush1.msra.mxu0 0.0
    %1132 = vmatprep.subr.mxu0 0.0
    %1133 = vmatpush1.msra.mxu0 0.0
    %1134 = vmatprep.subr.mxu0 0.0
    %1135 = vmatpush1.msra.mxu0 0.0
    %1136 = vmatprep.subr.mxu0 0.0
    %1137 = vmatpush1.msra.mxu0 0.0
    %1138 = vmatprep.subr.mxu0 0.0
    %1139 = vmatpush1.msra.mxu0 0.0
    %1140 = vmatprep.subr.mxu0 0.0
    %1141 = vmatpush1.msra.mxu0 0.0
    %1142 = vmatprep.subr.mxu0 0.0
    %1143 = vmatpush1.msra.mxu0 0.0
    %1144 = vmatprep.subr.mxu0 0.0
    %1145 = vmatpush1.msra.mxu0 0.0
    %1146 = vmatprep.subr.mxu0 0.0
    %1147 = vmatpush1.msra.mxu0 0.0
    %1148 = vmatprep.subr.mxu0 0.0
    %1149 = vmatpush1.msra.mxu0 0.0
    %1150 = vmatprep.subr.mxu0 0.0
    %1151 = vmatpush1.msra.mxu0 0.0
    %1152 = vmatprep.subr.mxu0 0.0
    %1153 = vmatpush1.msra.mxu0 0.0
    %1154 = vmatprep.subr.mxu0 0.0
    %1155 = vmatpush1.msra.mxu0 0.0
    %1156 = vmatprep.subr.mxu0 0.0
    %1157 = vmatpush1.msra.mxu0 0.0
    %1158 = vmatprep.subr.mxu0 0.0
    %1159 = vmatpush1.msra.mxu0 0.0
    %1160 = vmatprep.subr.mxu0 0.0
    %1161 = vmatpush1.msra.mxu0 0.0
    %1162 = vmatprep.subr.mxu0 0.0
    %1163 = vmatpush1.msra.mxu0 0.0
    %1164 = vmatprep.subr.mxu0 0.0
    %1165 = vmatpush1.msra.mxu0 0.0
    %1166 = vmatprep.subr.mxu0 0.0
    %1167 = vmatpush1.msra.mxu0 0.0
    %1168 = vmatprep.subr.mxu0 0.0
    %1169 = vmatpush1.msra.mxu0 0.0
    %1170 = vmatprep.subr.mxu0 0.0
    %1171 = vmatpush1.msra.mxu0 0.0
    %1172 = vmatprep.subr.mxu0 0.0
    %1173 = vmatpush1.msra.mxu0 0.0
    %1174 = vmatprep.subr.mxu0 0.0
    %1175 = vmatpush1.msra.mxu0 0.0
    %1176 = vmatprep.mubr.f32.mxu0 0.0
    %1177 = vmatmul.mubr.f32.gmra.mrb[0].mxu0 %v1104
    %v1178 = vpop.f32.mrb[0].mxu0
    %v1179 = vadd.f32 0.0, %v1178
    %v1180 = vpop.f32.mrb[0].mxu0
    %v1181 = vadd.f32 0.0, %v1180
    %1182 = vdwg.mxu0
    %v1184 = vsel %vm117, %v1081, 0
    %v1187 = vsel %vm162, %v1079, 0
    %v1190 = vsel %vm162, %v1080, 0
    %1192 = vmatprep.subr.mxu0 %v1190
    %1193 = vmatpush1.msra.mxu0 %v1187
    %1194 = vmatprep.subr.mxu0 0.0
    %1195 = vmatpush1.msra.mxu0 0.0
    %1196 = vmatprep.subr.mxu0 0.0
    %1197 = vmatpush1.msra.mxu0 0.0
    %1198 = vmatprep.subr.mxu0 0.0
    %1199 = vmatpush1.msra.mxu0 0.0
    %1200 = vmatprep.subr.mxu0 0.0
    %1201 = vmatpush1.msra.mxu0 0.0
    %1202 = vmatprep.subr.mxu0 0.0
    %1203 = vmatpush1.msra.mxu0 0.0
    %1204 = vmatprep.subr.mxu0 0.0
    %1205 = vmatpush1.msra.mxu0 0.0
    %1206 = vmatprep.subr.mxu0 0.0
    %1207 = vmatpush1.msra.mxu0 0.0
    %1208 = vmatprep.subr.mxu0 0.0
    %1209 = vmatpush1.msra.mxu0 0.0
    %1210 = vmatprep.subr.mxu0 0.0
    %1211 = vmatpush1.msra.mxu0 0.0
    %1212 = vmatprep.subr.mxu0 0.0
    %1213 = vmatpush1.msra.mxu0 0.0
    %1214 = vmatprep.subr.mxu0 0.0
    %1215 = vmatpush1.msra.mxu0 0.0
    %1216 = vmatprep.subr.mxu0 0.0
    %1217 = vmatpush1.msra.mxu0 0.0
    %1218 = vmatprep.subr.mxu0 0.0
    %1219 = vmatpush1.msra.mxu0 0.0
    %1220 = vmatprep.subr.mxu0 0.0
    %1221 = vmatpush1.msra.mxu0 0.0
    %1222 = vmatprep.subr.mxu0 0.0
    %1223 = vmatpush1.msra.mxu0 0.0
    %1224 = vmatprep.subr.mxu0 0.0
    %1225 = vmatpush1.msra.mxu0 0.0
    %1226 = vmatprep.subr.mxu0 0.0
    %1227 = vmatpush1.msra.mxu0 0.0
    %1228 = vmatprep.subr.mxu0 0.0
    %1229 = vmatpush1.msra.mxu0 0.0
    %1230 = vmatprep.subr.mxu0 0.0
    %1231 = vmatpush1.msra.mxu0 0.0
    %1232 = vmatprep.subr.mxu0 0.0
    %1233 = vmatpush1.msra.mxu0 0.0
    %1234 = vmatprep.subr.mxu0 0.0
    %1235 = vmatpush1.msra.mxu0 0.0
    %1236 = vmatprep.subr.mxu0 0.0
    %1237 = vmatpush1.msra.mxu0 0.0
    %1238 = vmatprep.subr.mxu0 0.0
    %1239 = vmatpush1.msra.mxu0 0.0
    %1240 = vmatprep.subr.mxu0 0.0
    %1241 = vmatpush1.msra.mxu0 0.0
    %1242 = vmatprep.subr.mxu0 0.0
    %1243 = vmatpush1.msra.mxu0 0.0
    %1244 = vmatprep.subr.mxu0 0.0
    %1245 = vmatpush1.msra.mxu0 0.0
    %1246 = vmatprep.subr.mxu0 0.0
    %1247 = vmatpush1.msra.mxu0 0.0
    %1248 = vmatprep.subr.mxu0 0.0
    %1249 = vmatpush1.msra.mxu0 0.0
    %1250 = vmatprep.subr.mxu0 0.0
    %1251 = vmatpush1.msra.mxu0 0.0
    %1252 = vmatprep.subr.mxu0 0.0
    %1253 = vmatpush1.msra.mxu0 0.0
    %1254 = vmatprep.subr.mxu0 0.0
    %1255 = vmatpush1.msra.mxu0 0.0
    %1256 = vmatprep.mubr.f32.mxu0 0.0
    %1257 = vmatmul.mubr.f32.gmra.mrb[0].mxu0 %v1184
    %v1258 = vpop.f32.mrb[0].mxu0
    %v1259 = vadd.f32 %v1179, %v1258
    %v1260 = vpop.f32.mrb[0].mxu0
    %v1261 = vadd.f32 %v1181, %v1260
    %1262 = vdwg.mxu0
    %1263 = vrot.lane.b32.xlu0 %v1060, 2
    %v1264 = vpop.permute.xlu0 %1263
    %1266 = vrot.lane.b32.xlu0 %v1058, 2
    %v1267 = vpop.permute.xlu0 %1266
    %v1268 = vsel %vm325, %v1267, %v1264
    %v1271 = vsel %vm325, %v1264, %v1267
    %1272 = vrot.lane.b32.xlu0 %v1058, 114
    %v1273 = vpop.permute.xlu0 %1272
    %1274 = vrot.lane.b32.xlu0 %v1060, 114
    %v1275 = vpop.permute.xlu0 %1274
    %v1276 = vsel %vm334, %v1273, %v1275
    %v1280 = vsel %vm334, %v1275, %v1273
    %v1281 = vsel %vm67, %v1271, %v1276
    %v1282 = vsel %vm68, %v1268, %v1280
    %v1283 = vld [vmem:[%s342] sm:$0xf]
    %v1285 = vsel %vm117, %v1283, 0
    %v1288 = vsel %vm162, %v1281, 0
    %v1291 = vsel %vm162, %v1282, 0
    %1293 = vmatprep.subr.mxu0 %v1291
    %1294 = vmatpush1.msra.mxu0 %v1288
    %1295 = vmatprep.subr.mxu0 0.0
    %1296 = vmatpush1.msra.mxu0 0.0
    %1297 = vmatprep.subr.mxu0 0.0
    %1298 = vmatpush1.msra.mxu0 0.0
    %1299 = vmatprep.subr.mxu0 0.0
    %1300 = vmatpush1.msra.mxu0 0.0
    %1301 = vmatprep.subr.mxu0 0.0
    %1302 = vmatpush1.msra.mxu0 0.0
    %1303 = vmatprep.subr.mxu0 0.0
    %1304 = vmatpush1.msra.mxu0 0.0
    %1305 = vmatprep.subr.mxu0 0.0
    %1306 = vmatpush1.msra.mxu0 0.0
    %1307 = vmatprep.subr.mxu0 0.0
    %1308 = vmatpush1.msra.mxu0 0.0
    %1309 = vmatprep.subr.mxu0 0.0
    %1310 = vmatpush1.msra.mxu0 0.0
    %1311 = vmatprep.subr.mxu0 0.0
    %1312 = vmatpush1.msra.mxu0 0.0
    %1313 = vmatprep.subr.mxu0 0.0
    %1314 = vmatpush1.msra.mxu0 0.0
    %1315 = vmatprep.subr.mxu0 0.0
    %1316 = vmatpush1.msra.mxu0 0.0
    %1317 = vmatprep.subr.mxu0 0.0
    %1318 = vmatpush1.msra.mxu0 0.0
    %1319 = vmatprep.subr.mxu0 0.0
    %1320 = vmatpush1.msra.mxu0 0.0
    %1321 = vmatprep.subr.mxu0 0.0
    %1322 = vmatpush1.msra.mxu0 0.0
    %1323 = vmatprep.subr.mxu0 0.0
    %1324 = vmatpush1.msra.mxu0 0.0
    %1325 = vmatprep.subr.mxu0 0.0
    %1326 = vmatpush1.msra.mxu0 0.0
    %1327 = vmatprep.subr.mxu0 0.0
    %1328 = vmatpush1.msra.mxu0 0.0
    %1329 = vmatprep.subr.mxu0 0.0
    %1330 = vmatpush1.msra.mxu0 0.0
    %1331 = vmatprep.subr.mxu0 0.0
    %1332 = vmatpush1.msra.mxu0 0.0
    %1333 = vmatprep.subr.mxu0 0.0
    %1334 = vmatpush1.msra.mxu0 0.0
    %1335 = vmatprep.subr.mxu0 0.0
    %1336 = vmatpush1.msra.mxu0 0.0
    %1337 = vmatprep.subr.mxu0 0.0
    %1338 = vmatpush1.msra.mxu0 0.0
    %1339 = vmatprep.subr.mxu0 0.0
    %1340 = vmatpush1.msra.mxu0 0.0
    %1341 = vmatprep.subr.mxu0 0.0
    %1342 = vmatpush1.msra.mxu0 0.0
    %1343 = vmatprep.subr.mxu0 0.0
    %1344 = vmatpush1.msra.mxu0 0.0
    %1345 = vmatprep.subr.mxu0 0.0
    %1346 = vmatpush1.msra.mxu0 0.0
    %1347 = vmatprep.subr.mxu0 0.0
    %1348 = vmatpush1.msra.mxu0 0.0
    %1349 = vmatprep.subr.mxu0 0.0
    %1350 = vmatpush1.msra.mxu0 0.0
    %1351 = vmatprep.subr.mxu0 0.0
    %1352 = vmatpush1.msra.mxu0 0.0
    %1353 = vmatprep.subr.mxu0 0.0
    %1354 = vmatpush1.msra.mxu0 0.0
    %1355 = vmatprep.subr.mxu0 0.0
    %1356 = vmatpush1.msra.mxu0 0.0
    %1357 = vmatprep.mubr.f32.mxu0 0.0
    %1358 = vmatmul.mubr.f32.gmra.mrb[0].mxu0 %v1285
    %v1359 = vpop.f32.mrb[0].mxu0
    %v1360 = vadd.f32 0.0, %v1359
    %v1361 = vpop.f32.mrb[0].mxu0
    %v1362 = vadd.f32 0.0, %v1361
    %1363 = vdwg.mxu0
    %v1364 = vadd.f32 %v1259, %v1360
    %v1365 = vadd.f32 %v1261, %v1362
    %1366 = vrot.lane.b32.xlu0 %v1060, 1
    %v1367 = vpop.permute.xlu0 %1366
    %1369 = vrot.lane.b32.xlu0 %v1058, 1
    %v1370 = vpop.permute.xlu0 %1369
    %v1371 = vsel %vm431, %v1370, %v1367
    %v1374 = vsel %vm431, %v1367, %v1370
    %1375 = vrot.lane.b32.xlu0 %v1058, 113
    %v1376 = vpop.permute.xlu0 %1375
    %1377 = vrot.lane.b32.xlu0 %v1060, 113
    %v1378 = vpop.permute.xlu0 %1377
    %v1379 = vsel %vm440, %v1376, %v1378
    %v1383 = vsel %vm440, %v1378, %v1376
    %v1384 = vsel %vm75, %v1374, %v1379
    %v1385 = vsel %vm76, %v1371, %v1383
    %v1386 = vld [vmem:[%s448] sm:$0xf]
    %v1388 = vsel %vm117, %v1386, 0
    %v1391 = vsel %vm162, %v1384, 0
    %v1394 = vsel %vm162, %v1385, 0
    %1396 = vmatprep.subr.mxu0 %v1394
    %1397 = vmatpush1.msra.mxu0 %v1391
    %1398 = vmatprep.subr.mxu0 0.0
    %1399 = vmatpush1.msra.mxu0 0.0
    %1400 = vmatprep.subr.mxu0 0.0
    %1401 = vmatpush1.msra.mxu0 0.0
    %1402 = vmatprep.subr.mxu0 0.0
    %1403 = vmatpush1.msra.mxu0 0.0
    %1404 = vmatprep.subr.mxu0 0.0
    %1405 = vmatpush1.msra.mxu0 0.0
    %1406 = vmatprep.subr.mxu0 0.0
    %1407 = vmatpush1.msra.mxu0 0.0
    %1408 = vmatprep.subr.mxu0 0.0
    %1409 = vmatpush1.msra.mxu0 0.0
    %1410 = vmatprep.subr.mxu0 0.0
    %1411 = vmatpush1.msra.mxu0 0.0
    %1412 = vmatprep.subr.mxu0 0.0
    %1413 = vmatpush1.msra.mxu0 0.0
    %1414 = vmatprep.subr.mxu0 0.0
    %1415 = vmatpush1.msra.mxu0 0.0
    %1416 = vmatprep.subr.mxu0 0.0
    %1417 = vmatpush1.msra.mxu0 0.0
    %1418 = vmatprep.subr.mxu0 0.0
    %1419 = vmatpush1.msra.mxu0 0.0
    %1420 = vmatprep.subr.mxu0 0.0
    %1421 = vmatpush1.msra.mxu0 0.0
    %1422 = vmatprep.subr.mxu0 0.0
    %1423 = vmatpush1.msra.mxu0 0.0
    %1424 = vmatprep.subr.mxu0 0.0
    %1425 = vmatpush1.msra.mxu0 0.0
    %1426 = vmatprep.subr.mxu0 0.0
    %1427 = vmatpush1.msra.mxu0 0.0
    %1428 = vmatprep.subr.mxu0 0.0
    %1429 = vmatpush1.msra.mxu0 0.0
    %1430 = vmatprep.subr.mxu0 0.0
    %1431 = vmatpush1.msra.mxu0 0.0
    %1432 = vmatprep.subr.mxu0 0.0
    %1433 = vmatpush1.msra.mxu0 0.0
    %1434 = vmatprep.subr.mxu0 0.0
    %1435 = vmatpush1.msra.mxu0 0.0
    %1436 = vmatprep.subr.mxu0 0.0
    %1437 = vmatpush1.msra.mxu0 0.0
    %1438 = vmatprep.subr.mxu0 0.0
    %1439 = vmatpush1.msra.mxu0 0.0
    %1440 = vmatprep.subr.mxu0 0.0
    %1441 = vmatpush1.msra.mxu0 0.0
    %1442 = vmatprep.subr.mxu0 0.0
    %1443 = vmatpush1.msra.mxu0 0.0
    %1444 = vmatprep.subr.mxu0 0.0
    %1445 = vmatpush1.msra.mxu0 0.0
    %1446 = vmatprep.subr.mxu0 0.0
    %1447 = vmatpush1.msra.mxu0 0.0
    %1448 = vmatprep.subr.mxu0 0.0
    %1449 = vmatpush1.msra.mxu0 0.0
    %1450 = vmatprep.subr.mxu0 0.0
    %1451 = vmatpush1.msra.mxu0 0.0
    %1452 = vmatprep.subr.mxu0 0.0
    %1453 = vmatpush1.msra.mxu0 0.0
    %1454 = vmatprep.subr.mxu0 0.0
    %1455 = vmatpush1.msra.mxu0 0.0
    %1456 = vmatprep.subr.mxu0 0.0
    %1457 = vmatpush1.msra.mxu0 0.0
    %1458 = vmatprep.subr.mxu0 0.0
    %1459 = vmatpush1.msra.mxu0 0.0
    %1460 = vmatprep.mubr.f32.mxu0 0.0
    %1461 = vmatmul.mubr.f32.gmra.mrb[0].mxu0 %v1388
    %v1462 = vpop.f32.mrb[0].mxu0
    %v1463 = vadd.f32 0.0, %v1462
    %v1464 = vpop.f32.mrb[0].mxu0
    %v1465 = vadd.f32 0.0, %v1464
    %1466 = vdwg.mxu0
    %v1467 = vadd.f32 %v1364, %v1463
    %v1468 = vadd.f32 %v1365, %v1465
    %v1469 = vld [vmem:[%s532] sm:$0xf]
    %v1471 = vsel %vm117, %v1469, 0
    %v1473 = vsel %vm162, %v1058, 0
    %v1475 = vsel %vm162, %v1060, 0
    %1477 = vmatprep.subr.mxu0 %v1475
    %1478 = vmatpush1.msra.mxu0 %v1473
    %1479 = vmatprep.subr.mxu0 0.0
    %1480 = vmatpush1.msra.mxu0 0.0
    %1481 = vmatprep.subr.mxu0 0.0
    %1482 = vmatpush1.msra.mxu0 0.0
    %1483 = vmatprep.subr.mxu0 0.0
    %1484 = vmatpush1.msra.mxu0 0.0
    %1485 = vmatprep.subr.mxu0 0.0
    %1486 = vmatpush1.msra.mxu0 0.0
    %1487 = vmatprep.subr.mxu0 0.0
    %1488 = vmatpush1.msra.mxu0 0.0
    %1489 = vmatprep.subr.mxu0 0.0
    %1490 = vmatpush1.msra.mxu0 0.0
    %1491 = vmatprep.subr.mxu0 0.0
    %1492 = vmatpush1.msra.mxu0 0.0
    %1493 = vmatprep.subr.mxu0 0.0
    %1494 = vmatpush1.msra.mxu0 0.0
    %1495 = vmatprep.subr.mxu0 0.0
    %1496 = vmatpush1.msra.mxu0 0.0
    %1497 = vmatprep.subr.mxu0 0.0
    %1498 = vmatpush1.msra.mxu0 0.0
    %1499 = vmatprep.subr.mxu0 0.0
    %1500 = vmatpush1.msra.mxu0 0.0
    %1501 = vmatprep.subr.mxu0 0.0
    %1502 = vmatpush1.msra.mxu0 0.0
    %1503 = vmatprep.subr.mxu0 0.0
    %1504 = vmatpush1.msra.mxu0 0.0
    %1505 = vmatprep.subr.mxu0 0.0
    %1506 = vmatpush1.msra.mxu0 0.0
    %1507 = vmatprep.subr.mxu0 0.0
    %1508 = vmatpush1.msra.mxu0 0.0
    %1509 = vmatprep.subr.mxu0 0.0
    %1510 = vmatpush1.msra.mxu0 0.0
    %1511 = vmatprep.subr.mxu0 0.0
    %1512 = vmatpush1.msra.mxu0 0.0
    %1513 = vmatprep.subr.mxu0 0.0
    %1514 = vmatpush1.msra.mxu0 0.0
    %1515 = vmatprep.subr.mxu0 0.0
    %1516 = vmatpush1.msra.mxu0 0.0
    %1517 = vmatprep.subr.mxu0 0.0
    %1518 = vmatpush1.msra.mxu0 0.0
    %1519 = vmatprep.subr.mxu0 0.0
    %1520 = vmatpush1.msra.mxu0 0.0
    %1521 = vmatprep.subr.mxu0 0.0
    %1522 = vmatpush1.msra.mxu0 0.0
    %1523 = vmatprep.subr.mxu0 0.0
    %1524 = vmatpush1.msra.mxu0 0.0
    %1525 = vmatprep.subr.mxu0 0.0
    %1526 = vmatpush1.msra.mxu0 0.0
    %1527 = vmatprep.subr.mxu0 0.0
    %1528 = vmatpush1.msra.mxu0 0.0
    %1529 = vmatprep.subr.mxu0 0.0
    %1530 = vmatpush1.msra.mxu0 0.0
    %1531 = vmatprep.subr.mxu0 0.0
    %1532 = vmatpush1.msra.mxu0 0.0
    %1533 = vmatprep.subr.mxu0 0.0
    %1534 = vmatpush1.msra.mxu0 0.0
    %1535 = vmatprep.subr.mxu0 0.0
    %1536 = vmatpush1.msra.mxu0 0.0
    %1537 = vmatprep.subr.mxu0 0.0
    %1538 = vmatpush1.msra.mxu0 0.0
    %1539 = vmatprep.subr.mxu0 0.0
    %1540 = vmatpush1.msra.mxu0 0.0
    %1541 = vmatprep.mubr.f32.mxu0 0.0
    %1542 = vmatmul.mubr.f32.gmra.mrb[0].mxu0 %v1471
    %v1543 = vpop.f32.mrb[0].mxu0
    %v1544 = vadd.f32 0.0, %v1543
    %v1545 = vpop.f32.mrb[0].mxu0
    %v1546 = vadd.f32 0.0, %v1545
    %1547 = vdwg.mxu0
    %v1548 = vadd.f32 %v1467, %v1544
    %v1549 = vadd.f32 %v1468, %v1546
    %1550 = vrot.lane.b32.xlu0 %v1058, 127
    %v1551 = vpop.permute.xlu0 %1550
    %1552 = vrot.lane.b32.xlu0 %v1060, 127
    %v1553 = vpop.permute.xlu0 %1552
    %v1554 = vsel %vm618, %v1551, %v1553
    %v1558 = vsel %vm618, %v1553, %v1551
    %1559 = vrot.lane.b32.xlu0 %v1060, 15
    %v1560 = vpop.permute.xlu0 %1559
    %1562 = vrot.lane.b32.xlu0 %v1058, 15
    %v1563 = vpop.permute.xlu0 %1562
    %v1564 = vsel %vm629, %v1563, %v1560
    %v1567 = vsel %vm629, %v1560, %v1563
    %v1568 = vsel %vm83, %v1554, %v1567
    %v1569 = vsel %vm84, %v1558, %v1564
    %v1570 = vld [vmem:[%s636] sm:$0xf]
    %v1572 = vsel %vm117, %v1570, 0
    %v1575 = vsel %vm162, %v1568, 0
    %v1578 = vsel %vm162, %v1569, 0
    %1580 = vmatprep.subr.mxu0 %v1578
    %1581 = vmatpush1.msra.mxu0 %v1575
    %1582 = vmatprep.subr.mxu0 0.0
    %1583 = vmatpush1.msra.mxu0 0.0
    %1584 = vmatprep.subr.mxu0 0.0
    %1585 = vmatpush1.msra.mxu0 0.0
    %1586 = vmatprep.subr.mxu0 0.0
    %1587 = vmatpush1.msra.mxu0 0.0
    %1588 = vmatprep.subr.mxu0 0.0
    %1589 = vmatpush1.msra.mxu0 0.0
    %1590 = vmatprep.subr.mxu0 0.0
    %1591 = vmatpush1.msra.mxu0 0.0
    %1592 = vmatprep.subr.mxu0 0.0
    %1593 = vmatpush1.msra.mxu0 0.0
    %1594 = vmatprep.subr.mxu0 0.0
    %1595 = vmatpush1.msra.mxu0 0.0
    %1596 = vmatprep.subr.mxu0 0.0
    %1597 = vmatpush1.msra.mxu0 0.0
    %1598 = vmatprep.subr.mxu0 0.0
    %1599 = vmatpush1.msra.mxu0 0.0
    %1600 = vmatprep.subr.mxu0 0.0
    %1601 = vmatpush1.msra.mxu0 0.0
    %1602 = vmatprep.subr.mxu0 0.0
    %1603 = vmatpush1.msra.mxu0 0.0
    %1604 = vmatprep.subr.mxu0 0.0
    %1605 = vmatpush1.msra.mxu0 0.0
    %1606 = vmatprep.subr.mxu0 0.0
    %1607 = vmatpush1.msra.mxu0 0.0
    %1608 = vmatprep.subr.mxu0 0.0
    %1609 = vmatpush1.msra.mxu0 0.0
    %1610 = vmatprep.subr.mxu0 0.0
    %1611 = vmatpush1.msra.mxu0 0.0
    %1612 = vmatprep.subr.mxu0 0.0
    %1613 = vmatpush1.msra.mxu0 0.0
    %1614 = vmatprep.subr.mxu0 0.0
    %1615 = vmatpush1.msra.mxu0 0.0
    %1616 = vmatprep.subr.mxu0 0.0
    %1617 = vmatpush1.msra.mxu0 0.0
    %1618 = vmatprep.subr.mxu0 0.0
    %1619 = vmatpush1.msra.mxu0 0.0
    %1620 = vmatprep.subr.mxu0 0.0
    %1621 = vmatpush1.msra.mxu0 0.0
    %1622 = vmatprep.subr.mxu0 0.0
    %1623 = vmatpush1.msra.mxu0 0.0
    %1624 = vmatprep.subr.mxu0 0.0
    %1625 = vmatpush1.msra.mxu0 0.0
    %1626 = vmatprep.subr.mxu0 0.0
    %1627 = vmatpush1.msra.mxu0 0.0
    %1628 = vmatprep.subr.mxu0 0.0
    %1629 = vmatpush1.msra.mxu0 0.0
    %1630 = vmatprep.subr.mxu0 0.0
    %1631 = vmatpush1.msra.mxu0 0.0
    %1632 = vmatprep.subr.mxu0 0.0
    %1633 = vmatpush1.msra.mxu0 0.0
    %1634 = vmatprep.subr.mxu0 0.0
    %1635 = vmatpush1.msra.mxu0 0.0
    %1636 = vmatprep.subr.mxu0 0.0
    %1637 = vmatpush1.msra.mxu0 0.0
    %1638 = vmatprep.subr.mxu0 0.0
    %1639 = vmatpush1.msra.mxu0 0.0
    %1640 = vmatprep.subr.mxu0 0.0
    %1641 = vmatpush1.msra.mxu0 0.0
    %1642 = vmatprep.subr.mxu0 0.0
    %1643 = vmatpush1.msra.mxu0 0.0
    %1644 = vmatprep.mubr.f32.mxu0 0.0
    %1645 = vmatmul.mubr.f32.gmra.mrb[0].mxu0 %v1572
    %v1646 = vpop.f32.mrb[0].mxu0
    %v1647 = vadd.f32 0.0, %v1646
    %v1648 = vpop.f32.mrb[0].mxu0
    %v1649 = vadd.f32 0.0, %v1648
    %1650 = vdwg.mxu0
    %v1651 = vadd.f32 %v1548, %v1647
    %v1652 = vadd.f32 %v1549, %v1649
    %1653 = vrot.lane.b32.xlu0 %v1058, 126
    %v1654 = vpop.permute.xlu0 %1653
    %1655 = vrot.lane.b32.xlu0 %v1060, 126
    %v1656 = vpop.permute.xlu0 %1655
    %v1657 = vsel %vm724, %v1654, %v1656
    %v1661 = vsel %vm724, %v1656, %v1654
    %1662 = vrot.lane.b32.xlu0 %v1060, 14
    %v1663 = vpop.permute.xlu0 %1662
    %1665 = vrot.lane.b32.xlu0 %v1058, 14
    %v1666 = vpop.permute.xlu0 %1665
    %v1667 = vsel %vm735, %v1666, %v1663
    %v1670 = vsel %vm735, %v1663, %v1666
    %v1671 = vsel %vm91, %v1657, %v1670
    %v1672 = vsel %vm92, %v1661, %v1667
    %v1673 = vld [vmem:[%s742] sm:$0xf]
    %v1675 = vsel %vm117, %v1673, 0
    %v1678 = vsel %vm162, %v1671, 0
    %v1681 = vsel %vm162, %v1672, 0
    %1683 = vmatprep.subr.mxu0 %v1681
    %1684 = vmatpush1.msra.mxu0 %v1678
    %1685 = vmatprep.subr.mxu0 0.0
    %1686 = vmatpush1.msra.mxu0 0.0
    %1687 = vmatprep.subr.mxu0 0.0
    %1688 = vmatpush1.msra.mxu0 0.0
    %1689 = vmatprep.subr.mxu0 0.0
    %1690 = vmatpush1.msra.mxu0 0.0
    %1691 = vmatprep.subr.mxu0 0.0
    %1692 = vmatpush1.msra.mxu0 0.0
    %1693 = vmatprep.subr.mxu0 0.0
    %1694 = vmatpush1.msra.mxu0 0.0
    %1695 = vmatprep.subr.mxu0 0.0
    %1696 = vmatpush1.msra.mxu0 0.0
    %1697 = vmatprep.subr.mxu0 0.0
    %1698 = vmatpush1.msra.mxu0 0.0
    %1699 = vmatprep.subr.mxu0 0.0
    %1700 = vmatpush1.msra.mxu0 0.0
    %1701 = vmatprep.subr.mxu0 0.0
    %1702 = vmatpush1.msra.mxu0 0.0
    %1703 = vmatprep.subr.mxu0 0.0
    %1704 = vmatpush1.msra.mxu0 0.0
    %1705 = vmatprep.subr.mxu0 0.0
    %1706 = vmatpush1.msra.mxu0 0.0
    %1707 = vmatprep.subr.mxu0 0.0
    %1708 = vmatpush1.msra.mxu0 0.0
    %1709 = vmatprep.subr.mxu0 0.0
    %1710 = vmatpush1.msra.mxu0 0.0
    %1711 = vmatprep.subr.mxu0 0.0
    %1712 = vmatpush1.msra.mxu0 0.0
    %1713 = vmatprep.subr.mxu0 0.0
    %1714 = vmatpush1.msra.mxu0 0.0
    %1715 = vmatprep.subr.mxu0 0.0
    %1716 = vmatpush1.msra.mxu0 0.0
    %1717 = vmatprep.subr.mxu0 0.0
    %1718 = vmatpush1.msra.mxu0 0.0
    %1719 = vmatprep.subr.mxu0 0.0
    %1720 = vmatpush1.msra.mxu0 0.0
    %1721 = vmatprep.subr.mxu0 0.0
    %1722 = vmatpush1.msra.mxu0 0.0
    %1723 = vmatprep.subr.mxu0 0.0
    %1724 = vmatpush1.msra.mxu0 0.0
    %1725 = vmatprep.subr.mxu0 0.0
    %1726 = vmatpush1.msra.mxu0 0.0
    %1727 = vmatprep.subr.mxu0 0.0
    %1728 = vmatpush1.msra.mxu0 0.0
    %1729 = vmatprep.subr.mxu0 0.0
    %1730 = vmatpush1.msra.mxu0 0.0
    %1731 = vmatprep.subr.mxu0 0.0
    %1732 = vmatpush1.msra.mxu0 0.0
    %1733 = vmatprep.subr.mxu0 0.0
    %1734 = vmatpush1.msra.mxu0 0.0
    %1735 = vmatprep.subr.mxu0 0.0
    %1736 = vmatpush1.msra.mxu0 0.0
    %1737 = vmatprep.subr.mxu0 0.0
    %1738 = vmatpush1.msra.mxu0 0.0
    %1739 = vmatprep.subr.mxu0 0.0
    %1740 = vmatpush1.msra.mxu0 0.0
    %1741 = vmatprep.subr.mxu0 0.0
    %1742 = vmatpush1.msra.mxu0 0.0
    %1743 = vmatprep.subr.mxu0 0.0
    %1744 = vmatpush1.msra.mxu0 0.0
    %1745 = vmatprep.subr.mxu0 0.0
    %1746 = vmatpush1.msra.mxu0 0.0
    %1747 = vmatprep.mubr.f32.mxu0 0.0
    %1748 = vmatmul.mubr.f32.gmra.mrb[0].mxu0 %v1675
    %v1749 = vpop.f32.mrb[0].mxu0
    %v1750 = vadd.f32 0.0, %v1749
    %v1751 = vpop.f32.mrb[0].mxu0
    %v1752 = vadd.f32 0.0, %v1751
    %1753 = vdwg.mxu0
    %v1754 = vadd.f32 %v1651, %v1750
    %v1755 = vadd.f32 %v1652, %v1752
    %1756 = vrot.lane.b32.xlu0 %v1058, 125
    %v1757 = vpop.permute.xlu0 %1756
    %1758 = vrot.lane.b32.xlu0 %v1060, 125
    %v1759 = vpop.permute.xlu0 %1758
    %v1760 = vsel %vm830, %v1757, %v1759
    %v1764 = vsel %vm830, %v1759, %v1757
    %1765 = vrot.lane.b32.xlu0 %v1060, 13
    %v1766 = vpop.permute.xlu0 %1765
    %1768 = vrot.lane.b32.xlu0 %v1058, 13
    %v1769 = vpop.permute.xlu0 %1768
    %v1770 = vsel %vm841, %v1769, %v1766
    %v1773 = vsel %vm841, %v1766, %v1769
    %v1774 = vsel %vm99, %v1760, %v1773
    %v1775 = vsel %vm100, %v1764, %v1770
    %v1776 = vld [vmem:[%s848] sm:$0xf]
    %v1778 = vsel %vm117, %v1776, 0
    %v1781 = vsel %vm162, %v1774, 0
    %v1784 = vsel %vm162, %v1775, 0
    %1786 = vmatprep.subr.mxu0 %v1784
    %1787 = vmatpush1.msra.mxu0 %v1781
    %1788 = vmatprep.subr.mxu0 0.0
    %1789 = vmatpush1.msra.mxu0 0.0
    %1790 = vmatprep.subr.mxu0 0.0
    %1791 = vmatpush1.msra.mxu0 0.0
    %1792 = vmatprep.subr.mxu0 0.0
    %1793 = vmatpush1.msra.mxu0 0.0
    %1794 = vmatprep.subr.mxu0 0.0
    %1795 = vmatpush1.msra.mxu0 0.0
    %1796 = vmatprep.subr.mxu0 0.0
    %1797 = vmatpush1.msra.mxu0 0.0
    %1798 = vmatprep.subr.mxu0 0.0
    %1799 = vmatpush1.msra.mxu0 0.0
    %1800 = vmatprep.subr.mxu0 0.0
    %1801 = vmatpush1.msra.mxu0 0.0
    %1802 = vmatprep.subr.mxu0 0.0
    %1803 = vmatpush1.msra.mxu0 0.0
    %1804 = vmatprep.subr.mxu0 0.0
    %1805 = vmatpush1.msra.mxu0 0.0
    %1806 = vmatprep.subr.mxu0 0.0
    %1807 = vmatpush1.msra.mxu0 0.0
    %1808 = vmatprep.subr.mxu0 0.0
    %1809 = vmatpush1.msra.mxu0 0.0
    %1810 = vmatprep.subr.mxu0 0.0
    %1811 = vmatpush1.msra.mxu0 0.0
    %1812 = vmatprep.subr.mxu0 0.0
    %1813 = vmatpush1.msra.mxu0 0.0
    %1814 = vmatprep.subr.mxu0 0.0
    %1815 = vmatpush1.msra.mxu0 0.0
    %1816 = vmatprep.subr.mxu0 0.0
    %1817 = vmatpush1.msra.mxu0 0.0
    %1818 = vmatprep.subr.mxu0 0.0
    %1819 = vmatpush1.msra.mxu0 0.0
    %1820 = vmatprep.subr.mxu0 0.0
    %1821 = vmatpush1.msra.mxu0 0.0
    %1822 = vmatprep.subr.mxu0 0.0
    %1823 = vmatpush1.msra.mxu0 0.0
    %1824 = vmatprep.subr.mxu0 0.0
    %1825 = vmatpush1.msra.mxu0 0.0
    %1826 = vmatprep.subr.mxu0 0.0
    %1827 = vmatpush1.msra.mxu0 0.0
    %1828 = vmatprep.subr.mxu0 0.0
    %1829 = vmatpush1.msra.mxu0 0.0
    %1830 = vmatprep.subr.mxu0 0.0
    %1831 = vmatpush1.msra.mxu0 0.0
    %1832 = vmatprep.subr.mxu0 0.0
    %1833 = vmatpush1.msra.mxu0 0.0
    %1834 = vmatprep.subr.mxu0 0.0
    %1835 = vmatpush1.msra.mxu0 0.0
    %1836 = vmatprep.subr.mxu0 0.0
    %1837 = vmatpush1.msra.mxu0 0.0
    %1838 = vmatprep.subr.mxu0 0.0
    %1839 = vmatpush1.msra.mxu0 0.0
    %1840 = vmatprep.subr.mxu0 0.0
    %1841 = vmatpush1.msra.mxu0 0.0
    %1842 = vmatprep.subr.mxu0 0.0
    %1843 = vmatpush1.msra.mxu0 0.0
    %1844 = vmatprep.subr.mxu0 0.0
    %1845 = vmatpush1.msra.mxu0 0.0
    %1846 = vmatprep.subr.mxu0 0.0
    %1847 = vmatpush1.msra.mxu0 0.0
    %1848 = vmatprep.subr.mxu0 0.0
    %1849 = vmatpush1.msra.mxu0 0.0
    %1850 = vmatprep.mubr.f32.mxu0 0.0
    %1851 = vmatmul.mubr.f32.gmra.mrb[0].mxu0 %v1778
    %v1852 = vpop.f32.mrb[0].mxu0
    %v1853 = vadd.f32 0.0, %v1852
    %v1854 = vpop.f32.mrb[0].mxu0
    %v1855 = vadd.f32 0.0, %v1854
    %1856 = vdwg.mxu0
    %v1857 = vadd.f32 %v1754, %v1853
    %v1858 = vadd.f32 %v1755, %v1855
    %1859 = vrot.lane.b32.xlu0 %v1058, 124
    %v1860 = vpop.permute.xlu0 %1859
    %1861 = vrot.lane.b32.xlu0 %v1060, 124
    %v1862 = vpop.permute.xlu0 %1861
    %v1863 = vsel %vm936, %v1860, %v1862
    %v1867 = vsel %vm936, %v1862, %v1860
    %1868 = vrot.lane.b32.xlu0 %v1060, 12
    %v1869 = vpop.permute.xlu0 %1868
    %1871 = vrot.lane.b32.xlu0 %v1058, 12
    %v1872 = vpop.permute.xlu0 %1871
    %v1873 = vsel %vm947, %v1872, %v1869
    %v1876 = vsel %vm947, %v1869, %v1872
    %v1877 = vsel %vm107, %v1863, %v1876
    %v1878 = vsel %vm108, %v1867, %v1873
    %v1879 = vld [vmem:[%s954] sm:$0xf]
    %v1881 = vsel %vm117, %v1879, 0
    %v1884 = vsel %vm162, %v1877, 0
    %v1887 = vsel %vm162, %v1878, 0
    %1889 = vmatprep.subr.mxu0 %v1887
    %1890 = vmatpush1.msra.mxu0 %v1884
    %1891 = vmatprep.subr.mxu0 0.0
    %1892 = vmatpush1.msra.mxu0 0.0
    %1893 = vmatprep.subr.mxu0 0.0
    %1894 = vmatpush1.msra.mxu0 0.0
    %1895 = vmatprep.subr.mxu0 0.0
    %1896 = vmatpush1.msra.mxu0 0.0
    %1897 = vmatprep.subr.mxu0 0.0
    %1898 = vmatpush1.msra.mxu0 0.0
    %1899 = vmatprep.subr.mxu0 0.0
    %1900 = vmatpush1.msra.mxu0 0.0
    %1901 = vmatprep.subr.mxu0 0.0
    %1902 = vmatpush1.msra.mxu0 0.0
    %1903 = vmatprep.subr.mxu0 0.0
    %1904 = vmatpush1.msra.mxu0 0.0
    %1905 = vmatprep.subr.mxu0 0.0
    %1906 = vmatpush1.msra.mxu0 0.0
    %1907 = vmatprep.subr.mxu0 0.0
    %1908 = vmatpush1.msra.mxu0 0.0
    %1909 = vmatprep.subr.mxu0 0.0
    %1910 = vmatpush1.msra.mxu0 0.0
    %1911 = vmatprep.subr.mxu0 0.0
    %1912 = vmatpush1.msra.mxu0 0.0
    %1913 = vmatprep.subr.mxu0 0.0
    %1914 = vmatpush1.msra.mxu0 0.0
    %1915 = vmatprep.subr.mxu0 0.0
    %1916 = vmatpush1.msra.mxu0 0.0
    %1917 = vmatprep.subr.mxu0 0.0
    %1918 = vmatpush1.msra.mxu0 0.0
    %1919 = vmatprep.subr.mxu0 0.0
    %1920 = vmatpush1.msra.mxu0 0.0
    %1921 = vmatprep.subr.mxu0 0.0
    %1922 = vmatpush1.msra.mxu0 0.0
    %1923 = vmatprep.subr.mxu0 0.0
    %1924 = vmatpush1.msra.mxu0 0.0
    %1925 = vmatprep.subr.mxu0 0.0
    %1926 = vmatpush1.msra.mxu0 0.0
    %1927 = vmatprep.subr.mxu0 0.0
    %1928 = vmatpush1.msra.mxu0 0.0
    %1929 = vmatprep.subr.mxu0 0.0
    %1930 = vmatpush1.msra.mxu0 0.0
    %1931 = vmatprep.subr.mxu0 0.0
    %1932 = vmatpush1.msra.mxu0 0.0
    %1933 = vmatprep.subr.mxu0 0.0
    %1934 = vmatpush1.msra.mxu0 0.0
    %1935 = vmatprep.subr.mxu0 0.0
    %1936 = vmatpush1.msra.mxu0 0.0
    %1937 = vmatprep.subr.mxu0 0.0
    %1938 = vmatpush1.msra.mxu0 0.0
    %1939 = vmatprep.subr.mxu0 0.0
    %1940 = vmatpush1.msra.mxu0 0.0
    %1941 = vmatprep.subr.mxu0 0.0
    %1942 = vmatpush1.msra.mxu0 0.0
    %1943 = vmatprep.subr.mxu0 0.0
    %1944 = vmatpush1.msra.mxu0 0.0
    %1945 = vmatprep.subr.mxu0 0.0
    %1946 = vmatpush1.msra.mxu0 0.0
    %1947 = vmatprep.subr.mxu0 0.0
    %1948 = vmatpush1.msra.mxu0 0.0
    %1949 = vmatprep.subr.mxu0 0.0
    %1950 = vmatpush1.msra.mxu0 0.0
    %1951 = vmatprep.subr.mxu0 0.0
    %1952 = vmatpush1.msra.mxu0 0.0
    %1953 = vmatprep.mubr.f32.mxu0 0.0
    %1954 = vmatmul.mubr.f32.gmra.mrb[0].mxu0 %v1881
    %v1955 = vpop.f32.mrb[0].mxu0
    %v1956 = vadd.f32 0.0, %v1955
    %v1957 = vpop.f32.mrb[0].mxu0
    %v1958 = vadd.f32 0.0, %v1957
    %1959 = vdwg.mxu0
    %v1960 = vadd.f32 %v1857, %v1956
    %v1961 = vadd.f32 %v1858, %v1958
    %v1964 = vcombine.low %v1960, %v1961
    %s1966 = scalar_lea.vmem [#allocation2], 8
    %1967 = vst [vmem:[%s1966] sm:$0xff] %v1964
    %v1968 = vsel %vm162, %v1960, 0.0
    %v1969 = vsel %vm162, %v1961, 0.0
    %v1970 = vadd.f32 %v1968, %v1969
    %1971 = vadd.xlane.f32.xlu0 %v1970
    %v1972 = vpop.xlane.xlu0 %1971
    %v1973 = vadd.f32 %v1048, %v1972
    %v1974 = vmul.f32 %v1960, %v1960
    %v1975 = vmul.f32 %v1961, %v1961
    %v1976 = vsel %vm162, %v1974, 0.0
    %v1977 = vsel %vm162, %v1975, 0.0
    %v1978 = vadd.f32 %v1976, %v1977
    %1979 = vadd.xlane.f32.xlu0 %v1978
    %v1980 = vpop.xlane.xlu0 %1979
    %v1981 = vadd.f32 %v1056, %v1980
    %v1982 = vmul.f32 %v1973, 0.001953125
    %v1983 = vmul.f32 %v1981, 0.001953125
    %v1984 = vmul.f32 %v1982, %v1982
    %v1985 = vsub.f32 %v1983, %v1984
    %v1986 = vmax.f32 %v1985, 0.0
    %v1987 = vadd.f32 %v1986, 1e-05
    %v1988 = vrsqrt.pop %v1987
    %v1989 = vld [vmem:[%s2] sm:$0xf]
    %v1990 = vmul.f32 %v1988, %v1989
    %v1991 = vld [vmem:[%s3] sm:$0xf]
    %v1992 = vmul.f32 %v1982, %v1990
    %v1993 = vsub.f32 %v1991, %v1992
    %v1994 = vld [vmem:[#allocation2] sm:$0xff]
    %1996 = vset.pattern.permute.xlu0 0
    %1997 = vperm.xlu0 %1996, %v1990
    %v1998 = vpop.permute.xlu0 %1997
    %v2000 = vunpack.c.l.s4 839922192
    %v2001 = vunpack.c.0.s8 %v2000
    %v2002 = vlaneseq
    %v2003 = vshrl.u32 %v2002, 7
    %v2004 = vsub.s32 %v2001, %v2003
    %v2005 = vrot.slane %v1998, %v2004
    %v2007 = vmul.f32 %v1994, %v2005
    %2009 = vset.pattern.permute.xlu0 0
    %2010 = vperm.xlu0 %2009, %v1993
    %v2011 = vpop.permute.xlu0 %2010
    %v2013 = vunpack.c.l.s4 839922192
    %v2014 = vunpack.c.0.s8 %v2013
    %v2015 = vlaneseq
    %v2016 = vshrl.u32 %v2015, 7
    %v2017 = vsub.s32 %v2014, %v2016
    %v2018 = vrot.slane %v2011, %v2017
    %v2020 = vadd.f32 %v2007, %v2018
    %vm2021 = vcmp.ge.f32.partialorder %v2020, 0.0
    %v2022 = vmul.f32 %v2020, 0.01
    %v2023 = vsel %vm2021, %v2020, %v2022
    %2024 = vst [vmem:[#allocation3] sm:$0xff] %v2023
    %v2025 = vld [vmem:[%s1966] sm:$0xff]
    %v2026 = vmul.f32 %v2025, %v2005
    %v2027 = vadd.f32 %v2026, %v2018
    %vm2028 = vcmp.ge.f32.partialorder %v2027, 0.0
    %v2029 = vmul.f32 %v2027, 0.01
    %v2030 = vsel %vm2028, %v2027, %v2029
    %s2031 = scalar_lea.vmem [#allocation3], 8
    %2032 = vst [vmem:[%s2031] sm:$0xff] %v2030
    // Predicated region
    $region18: #{tpu_custom_call.1} parent=1 // pred_check
      _
    $region19: #{tpu_custom_call.1} parent=1 // pred_check_branch
      %2034 = sbr.rel (0) target = $region21
    $region20: #{tpu_custom_call.1} parent=1 // pred_region
      %s2036 = ssub.s32 256, 256
      %2037 = vsyncadd [#allocation4], %s2036
      %s2038 = sshll.u32 [#allocation3], 4
      %s2039 = int_to_ptr.vmem [resolvable:$true] %s2038
      %2044 = dma.vmem_to_hbm [thread:$0]  %s2039, 256, %s4, [#allocation4], 128, 128, 8
    $region21: #{tpu_custom_call.1} parent=1 // pred_fallthru
      _
    // Predicated region
    $region22: #{tpu_custom_call.1} parent=1 // pred_check
      _
    $region23: #{tpu_custom_call.1} parent=1 // pred_check_branch
      %2046 = sbr.rel (0) target = $region25
    $region24: #{tpu_custom_call.1} parent=1 // pred_region
      %2047 = dma.done [#allocation4], 256
    $region25: #{tpu_custom_call.1} parent=1 // pred_fallthru
      _
    %2048 = vsyncpa [#allocation4], 1

</llo_original>
